<compile_context>
chip_gen: v7x
topology: tpu7x:2x2x1
jax: 0.10.0
libtpu: 0.0.40
codegen_flags: <defaults>
</compile_context>

<pallas_src>
import functools

import jax
import jax.numpy as jnp
from jax.experimental import pallas as pl
from jax.experimental.pallas import tpu as pltpu

LANE = 128  # TPU lane width; narrow feature dims are padded up to this.


def qnet_kernel(x_ref, w1_ref, wstack_ref, bstack_ref, o_ref):
    """One batch tile: relu(x@W1+b1) -> relu(@W2+b2) -> relu(@W3+b3) -> @W4+b4."""
    wd = w1_ref.dtype
    x = x_ref[...].astype(wd)
    # Layer 1: (tile, state) @ (state, 128)
    h = jnp.maximum(
        jnp.dot(x, w1_ref[...], preferred_element_type=jnp.float32)
        + bstack_ref[0:1, :], 0.0)
    # Layer 2: (tile, 128) @ (128, 128)
    h = jnp.maximum(
        jnp.dot(h.astype(wd), wstack_ref[0], preferred_element_type=jnp.float32)
        + bstack_ref[1:2, :], 0.0)
    # Layer 3: (tile, 128) @ (128, 128)  (real width 64; zero-padded cols -> ReLU(0) = 0)
    h = jnp.maximum(
        jnp.dot(h.astype(wd), wstack_ref[1], preferred_element_type=jnp.float32)
        + bstack_ref[2:3, :], 0.0)
    # Layer 4: (tile, 128) @ (128, 128); only the real action columns are stored.
    q = (jnp.dot(h.astype(wd), wstack_ref[2], preferred_element_type=jnp.float32)
         + bstack_ref[3:4, :])
    o_ref[...] = q[:, :o_ref.shape[1]].astype(o_ref.dtype)


def _pad_axis(a, axis, target):
    pad = target - a.shape[axis]
    if pad <= 0:
        return a
    widths = [(0, 0)] * a.ndim
    widths[axis] = (0, pad)
    return jnp.pad(a, widths)


def pack_params(params, weight_dtype=jnp.bfloat16):
    """One-time layout packing (done at init, NOT per forward call).

    Returns dict with:
      w1     : (state_size, 128)  weight_dtype
      wstack : (3, 128, 128)      weight_dtype   [W2; W3 lane-padded; W4 row+lane padded]
      bstack : (4, 128)           float32        [b1; b2; b3 padded; b4 padded]
    """
    w1 = params["w1"].astype(weight_dtype)
    w2 = params["w2"]
    w3 = _pad_axis(params["w3"], 1, LANE)                      # (128, 64) -> (128, 128)
    w4 = _pad_axis(_pad_axis(params["w4"], 0, LANE), 1, LANE)  # (64, A)   -> (128, 128)
    wstack = jnp.stack([w2, w3, w4]).astype(weight_dtype)      # (3, 128, 128)

    bstack = jnp.stack([
        params["b1"].reshape(-1),
        params["b2"].reshape(-1),
        _pad_axis(params["b3"].reshape(-1), 0, LANE),
        _pad_axis(params["b4"].reshape(-1), 0, LANE),
    ]).astype(jnp.float32)                                     # (4, 128)
    return {"w1": w1, "wstack": wstack, "bstack": bstack}


def _pick_batch_tile(batch, max_tile=1024):
    # Target 512-1024 rows per grid step (amortizes ~0.35 us/step), but keep >= 2 grid steps
    # when the batch allows it so v7x's 2 TensorCores both get a share of the parallel axis.
    half = 256 * pl.cdiv(pl.cdiv(batch, 2), 256)
    return int(max(256, min(max_tile, half)))


@functools.partial(jax.jit, static_argnames=("num_actions", "batch_tile"))
def qnetwork_forward(x, w1, wstack, bstack, *, num_actions, batch_tile=None):
    """x: (B, state_size) f32. Packed params from pack_params(). Returns (B, num_actions) f32."""
    B, state_size = x.shape
    if batch_tile is None:
        batch_tile = _pick_batch_tile(B)

    # Pad batch to a multiple of batch_tile (zero rows; sliced off below). Fused under jit.
    B_pad = batch_tile * pl.cdiv(B, batch_tile)
    x_p = _pad_axis(x, 0, B_pad)
    grid = (B_pad // batch_tile,)

    def full_spec(shape):
        return pl.BlockSpec(shape, lambda i: tuple(0 for _ in shape))

    out = pl.pallas_call(
        qnet_kernel,
        out_shape=jax.ShapeDtypeStruct((B_pad, num_actions), jnp.float32),
        grid_spec=pltpu.PrefetchScalarGridSpec(
            num_scalar_prefetch=0,
            grid=grid,
            in_specs=[
                pl.BlockSpec((batch_tile, state_size), lambda i: (i, 0)),
                full_spec(w1.shape),        # weights stay VMEM-resident across grid steps
                full_spec(wstack.shape),
                full_spec(bstack.shape),
            ],
            out_specs=pl.BlockSpec((batch_tile, num_actions), lambda i: (i, 0)),
        ),
        compiler_params=pltpu.CompilerParams(
            dimension_semantics=("parallel",)),   # grid >= 2 shards across v7x's 2 TCs
    )(x_p, w1, wstack, bstack)

    return out[:B]


def init_params(key, state_size, num_actions):
    """Deterministic init mimicking PyTorch Linear default (uniform +/- 1/sqrt(fan_in))."""
    dims = [(state_size, 128), (128, 128), (128, 64), (64, num_actions)]
    params = {}
    for idx, (fan_in, fan_out) in enumerate(dims, start=1):
        key, kw, kb = jax.random.split(key, 3)
        bound = 1.0 / jnp.sqrt(float(fan_in))
        params[f"w{idx}"] = jax.random.uniform(
            kw, (fan_in, fan_out), jnp.float32, -bound, bound)
        params[f"b{idx}"] = jax.random.uniform(
            kb, (1, fan_out), jnp.float32, -bound, bound)
    return params


def qnetwork_ref(x, params):
    h = jnp.maximum(x @ params["w1"] + params["b1"], 0.0)
    h = jnp.maximum(h @ params["w2"] + params["b2"], 0.0)
    h = jnp.maximum(h @ params["w3"] + params["b3"], 0.0)
    return h @ params["w4"] + params["b4"]


if __name__ == "__main__":
    key = jax.random.PRNGKey(0)
    state_size = 8
    num_actions = 4
    batch = 300   # not a multiple of the tile -> exercises pad/slice path; grid of 2 steps

    kx, kp = jax.random.split(key)
    x = jax.random.normal(kx, (batch, state_size), jnp.float32)
    params = init_params(kp, state_size, num_actions)
    ref = qnetwork_ref(x, params)

    # Exact path (f32 weights): padding / stacking must be numerically harmless.
    p32 = pack_params(params, weight_dtype=jnp.float32)
    out32 = qnetwork_forward(x, p32["w1"], p32["wstack"], p32["bstack"],
                             num_actions=num_actions)
    out32 = jax.block_until_ready(out32)
    assert out32.shape == (batch, num_actions)
    assert jnp.allclose(out32, ref, atol=1e-5, rtol=1e-5)

    # Default fast path: bf16 weights/activations, f32 accumulate + f32 bias/ReLU.
    pbf = pack_params(params)   # bf16 default
    outbf = qnetwork_forward(x, pbf["w1"], pbf["wstack"], pbf["bstack"],
                             num_actions=num_actions)
    outbf = jax.block_until_ready(outbf)
    assert outbf.shape == (batch, num_actions)
    assert jnp.allclose(outbf, ref, atol=5e-2, rtol=5e-2)

    print("KERNEL_OK")
</pallas_src>

<mosaic_0001>
module attributes {stable_mosaic.version = 11 : i64} {
  func.func @qnet_kernel(%arg0: i32, %arg1: memref<256x8xf32, #tpu.memory_space<vmem>>, %arg2: memref<8x128xf32, #tpu.memory_space<vmem>>, %arg3: memref<3x128x128xf32, #tpu.memory_space<vmem>>, %arg4: memref<4x128xf32, #tpu.memory_space<vmem>>, %arg5: memref<256x4xf32, #tpu.memory_space<vmem>>) attributes {dimension_semantics = [#tpu.dimension_semantics<parallel>], iteration_bounds = array<i64: 2>, scalar_prefetch = 0 : i64, scratch_operands = 0 : i64, tpu.core_type = #tpu.core_type<tc>, window_params = [{transform_indices = @transform_0, window_bounds = array<i64: 256, 8>}, {pipeline_mode = #tpu.pipeline_mode<synchronous>, transform_indices = @transform_1, window_bounds = array<i64: 8, 128>}, {pipeline_mode = #tpu.pipeline_mode<synchronous>, transform_indices = @transform_2, window_bounds = array<i64: 3, 128, 128>}, {pipeline_mode = #tpu.pipeline_mode<synchronous>, transform_indices = @transform_3, window_bounds = array<i64: 4, 128>}, {transform_indices = @transform_4, window_bounds = array<i64: 256, 4>}]} {
    %c0 = arith.constant 0 : index
    %c0_0 = arith.constant 0 : index
    %0 = vector.load %arg1[%c0, %c0_0] : memref<256x8xf32, #tpu.memory_space<vmem>>, vector<256x8xf32>
    %c0_1 = arith.constant 0 : index
    %c0_2 = arith.constant 0 : index
    %1 = vector.load %arg2[%c0_1, %c0_2] : memref<8x128xf32, #tpu.memory_space<vmem>>, vector<8x128xf32>
    %cst = arith.constant dense<0.000000e+00> : vector<256x128xf32>
    %2 = tpu.matmul %0, %1, %cst {dimension_numbers = #tpu.dot_dimension_numbers<[1], [0], [0], [1], [0, 0, 1, 1], [], []>} : vector<256x8xf32>, vector<8x128xf32>, vector<256x128xf32> -> vector<256x128xf32>
    %c0_3 = arith.constant 0 : index
    %c0_4 = arith.constant 0 : index
    %3 = vector.load %arg4[%c0_3, %c0_4] : memref<4x128xf32, #tpu.memory_space<vmem>>, vector<1x128xf32>
    %4 = vector.broadcast %3 : vector<1x128xf32> to vector<256x128xf32>
    %5 = arith.addf %2, %4 : vector<256x128xf32>
    %cst_5 = arith.constant 0.000000e+00 : f32
    %6 = vector.broadcast %cst_5 : f32 to vector<256x128xf32>
    %7 = arith.maximumf %5, %6 : vector<256x128xf32>
    %c0_6 = arith.constant 0 : index
    %c0_7 = arith.constant 0 : index
    %c0_8 = arith.constant 0 : index
    %8 = vector.load %arg3[%c0_6, %c0_7, %c0_8] : memref<3x128x128xf32, #tpu.memory_space<vmem>>, vector<1x128x128xf32>
    %9 = vector.shape_cast %8 : vector<1x128x128xf32> to vector<128x128xf32>
    %cst_9 = arith.constant dense<0.000000e+00> : vector<256x128xf32>
    %10 = tpu.matmul %7, %9, %cst_9 {dimension_numbers = #tpu.dot_dimension_numbers<[1], [0], [0], [1], [0, 0, 1, 1], [], []>} : vector<256x128xf32>, vector<128x128xf32>, vector<256x128xf32> -> vector<256x128xf32>
    %c1 = arith.constant 1 : index
    %c0_10 = arith.constant 0 : index
    %11 = vector.load %arg4[%c1, %c0_10] : memref<4x128xf32, #tpu.memory_space<vmem>>, vector<1x128xf32>
    %12 = vector.broadcast %11 : vector<1x128xf32> to vector<256x128xf32>
    %13 = arith.addf %10, %12 : vector<256x128xf32>
    %cst_11 = arith.constant 0.000000e+00 : f32
    %14 = vector.broadcast %cst_11 : f32 to vector<256x128xf32>
    %15 = arith.maximumf %13, %14 : vector<256x128xf32>
    %c1_12 = arith.constant 1 : index
    %c0_13 = arith.constant 0 : index
    %c0_14 = arith.constant 0 : index
    %16 = vector.load %arg3[%c1_12, %c0_13, %c0_14] : memref<3x128x128xf32, #tpu.memory_space<vmem>>, vector<1x128x128xf32>
    %17 = vector.shape_cast %16 : vector<1x128x128xf32> to vector<128x128xf32>
    %cst_15 = arith.constant dense<0.000000e+00> : vector<256x128xf32>
    %18 = tpu.matmul %15, %17, %cst_15 {dimension_numbers = #tpu.dot_dimension_numbers<[1], [0], [0], [1], [0, 0, 1, 1], [], []>} : vector<256x128xf32>, vector<128x128xf32>, vector<256x128xf32> -> vector<256x128xf32>
    %c2 = arith.constant 2 : index
    %c0_16 = arith.constant 0 : index
    %19 = vector.load %arg4[%c2, %c0_16] : memref<4x128xf32, #tpu.memory_space<vmem>>, vector<1x128xf32>
    %20 = vector.broadcast %19 : vector<1x128xf32> to vector<256x128xf32>
    %21 = arith.addf %18, %20 : vector<256x128xf32>
    %cst_17 = arith.constant 0.000000e+00 : f32
    %22 = vector.broadcast %cst_17 : f32 to vector<256x128xf32>
    %23 = arith.maximumf %21, %22 : vector<256x128xf32>
    %c2_18 = arith.constant 2 : index
    %c0_19 = arith.constant 0 : index
    %c0_20 = arith.constant 0 : index
    %24 = vector.load %arg3[%c2_18, %c0_19, %c0_20] : memref<3x128x128xf32, #tpu.memory_space<vmem>>, vector<1x128x128xf32>
    %25 = vector.shape_cast %24 : vector<1x128x128xf32> to vector<128x128xf32>
    %cst_21 = arith.constant dense<0.000000e+00> : vector<256x128xf32>
    %26 = tpu.matmul %23, %25, %cst_21 {dimension_numbers = #tpu.dot_dimension_numbers<[1], [0], [0], [1], [0, 0, 1, 1], [], []>} : vector<256x128xf32>, vector<128x128xf32>, vector<256x128xf32> -> vector<256x128xf32>
    %c3 = arith.constant 3 : index
    %c0_22 = arith.constant 0 : index
    %27 = vector.load %arg4[%c3, %c0_22] : memref<4x128xf32, #tpu.memory_space<vmem>>, vector<1x128xf32>
    %28 = vector.broadcast %27 : vector<1x128xf32> to vector<256x128xf32>
    %29 = arith.addf %26, %28 : vector<256x128xf32>
    %30 = vector.extract_strided_slice %29 {offsets = [0, 0], sizes = [256, 4], strides = [1, 1]} : vector<256x128xf32> to vector<256x4xf32>
    %c0_23 = arith.constant 0 : index
    %c0_24 = arith.constant 0 : index
    %31 = vector.load %arg5[%c0_23, %c0_24] : memref<256x4xf32, #tpu.memory_space<vmem>>, vector<256x4xf32>
    tpu.vector_store %arg5[%c0_23, %c0_24], %30 {strides = array<i32>} : memref<256x4xf32, #tpu.memory_space<vmem>>, vector<256x4xf32>,
    return
  }
  func.func @transform_0(%arg0: i32) -> (i32, i32) {
    %c0_i32 = arith.constant 0 : i32
    %c0_i32_0 = arith.constant 0 : i32
    return %arg0, %c0_i32 : i32, i32
  }
  func.func @transform_1(%arg0: i32) -> (i32, i32) {
    %c0_i32 = arith.constant 0 : i32
    %c0_i32_0 = arith.constant 0 : i32
    %c0_i32_1 = arith.constant 0 : i32
    return %c0_i32, %c0_i32_0 : i32, i32
  }
  func.func @transform_2(%arg0: i32) -> (i32, i32, i32) {
    %c0_i32 = arith.constant 0 : i32
    %c0_i32_0 = arith.constant 0 : i32
    %c0_i32_1 = arith.constant 0 : i32
    %c0_i32_2 = arith.constant 0 : i32
    return %c0_i32, %c0_i32_0, %c0_i32_1 : i32, i32, i32
  }
  func.func @transform_3(%arg0: i32) -> (i32, i32) {
    %c0_i32 = arith.constant 0 : i32
    %c0_i32_0 = arith.constant 0 : i32
    %c0_i32_1 = arith.constant 0 : i32
    return %c0_i32, %c0_i32_0 : i32, i32
  }
  func.func @transform_4(%arg0: i32) -> (i32, i32) {
    %c0_i32 = arith.constant 0 : i32
    %c0_i32_0 = arith.constant 0 : i32
    return %arg0, %c0_i32 : i32, i32
  }
}

</mosaic_0001>

<llo_original>
// kernel: qnetwork_forward.1
$region0: #{qnetwork_forward.1}
  #allocation0 [shape = 'u32[]', space=smem, size = 0x4, offset = 0x4, fixed_abs, tag = 'smem constant byte address 0x4 - core index']
  #allocation1 [shape = 'u32[144,128]{1,0:T(1,128)}', space=vmem, size = 0x12000, scoped, tag = 'internal scratch']
  %s0 = inlined_call_operand.vmem [shape: f32[512,8], index: 0, kind: input, shape index: {}]
  %s1 = inlined_call_operand.vmem [shape: f32[8,128], index: 1, kind: input, shape index: {}]
  %s2 = inlined_call_operand.vmem [shape: f32[3,128,128], index: 2, kind: input, shape index: {}]
  %s3 = inlined_call_operand.vmem [shape: f32[4,128], index: 3, kind: input, shape index: {}]
  %s4 = inlined_call_operand.vmem [shape: f32[512,4], index: 4, kind: output, shape index: {}]
  %s5 = sld [smem:[#allocation0]]
  $region49: #{qnetwork_forward.1} parent=0
    _
  %s7 = ssub.s32 1, %s5
  %s8 = scalar_select 0, %s7, %s5
  loop: start=0, step=1, limit=4
  $region2: #{qnetwork_forward.1} parent=0 // loop_pre_header
    _
  $region3: #{qnetwork_forward.1} parent=0 // loop_header
    %s10 = sphi 0, %s14
    %p11 = scmp.ge.s32.totalorder %s10, 4
    %s20 = sphi 0, %s22
    %s23 = sphi 0, %s20
    %s24 = sphi 0, %s23
    %s40 = sphi 0, %s24
    %s44 = sphi 0, %s44
    %s46 = sphi 0, %s44
    %s47 = sphi 0, %s46
    %s61 = sphi 0, %s47
    %s65 = sphi 0, %s65
    %s67 = sphi 0, %s65
    %s68 = sphi 0, %s67
    %s82 = sphi 0, %s68
    %s86 = sphi 0, %s86
    %s88 = sphi 0, %s86
    %s89 = sphi 0, %s88
    %s103 = sphi 0, %s89
    %s109 = sphi 0, %s111
    %s112 = sphi 0, %s109
    %s113 = sphi 0, %s112
    %s129 = sphi 0, %s113
  $region4: #{qnetwork_forward.1} parent=0 // loop_header_branch
    %13 = sbr.rel (%p11) target = $region8
  $region5: #{qnetwork_forward.1} parent=0 // loop_body
    %s15 = ssub.s32 %s10, 1
    %s16 = ssub.s32 %s10, 2
    %s17 = sadd.s32 %s10, 1
    %s18 = ssub.s32 %s10, %s17
    %p19 = scmp.eq.s32.totalorder %s18, 0
    %s21 = sadd.s32 %s20, 1
    %s22 = scalar_select %p19, %s20, %s21
    %p25 = pneg %p19
    %p26 = scmp.eq.s32.totalorder %s10, 1
    %p27 = por %p25, %p26
    %p28 = scmp.ne.s32.totalorder %s20, %s23
    %p29 = scmp.eq.s32.totalorder %s10, 0
    %p30 = por %p28, %p29
    %p31 = scmp.ne.s32.totalorder %s20, %s23
    %p32 = scmp.eq.s32.totalorder %s15, 1
    %p33 = por %p31, %p32
    %p34 = scmp.ne.s32.totalorder %s23, %s24
    %p35 = scmp.eq.s32.totalorder %s15, 0
    %p36 = por %p34, %p35
    %p37 = scmp.ne.s32.totalorder %s23, %s24
    %p38 = scmp.eq.s32.totalorder %s16, 1
    %p39 = por %p37, %p38
    %p41 = scmp.ne.s32.totalorder %s24, %s40
    %p42 = scmp.eq.s32.totalorder %s16, 0
    %p43 = por %p41, %p42
    %s45 = sadd.s32 %s44, 1
    %p48 = scmp.eq.s32.totalorder %s10, 1
    %p49 = scmp.ne.s32.totalorder %s44, %s46
    %p50 = scmp.eq.s32.totalorder %s10, 0
    %p51 = por %p49, %p50
    %p52 = scmp.ne.s32.totalorder %s44, %s46
    %p53 = scmp.eq.s32.totalorder %s15, 1
    %p54 = por %p52, %p53
    %p55 = scmp.ne.s32.totalorder %s46, %s47
    %p56 = scmp.eq.s32.totalorder %s15, 0
    %p57 = por %p55, %p56
    %p58 = scmp.ne.s32.totalorder %s46, %s47
    %p59 = scmp.eq.s32.totalorder %s16, 1
    %p60 = por %p58, %p59
    %p62 = scmp.ne.s32.totalorder %s47, %s61
    %p63 = scmp.eq.s32.totalorder %s16, 0
    %p64 = por %p62, %p63
    %s66 = sadd.s32 %s65, 1
    %p69 = scmp.eq.s32.totalorder %s10, 1
    %p70 = scmp.ne.s32.totalorder %s65, %s67
    %p71 = scmp.eq.s32.totalorder %s10, 0
    %p72 = por %p70, %p71
    %p73 = scmp.ne.s32.totalorder %s65, %s67
    %p74 = scmp.eq.s32.totalorder %s15, 1
    %p75 = por %p73, %p74
    %p76 = scmp.ne.s32.totalorder %s67, %s68
    %p77 = scmp.eq.s32.totalorder %s15, 0
    %p78 = por %p76, %p77
    %p79 = scmp.ne.s32.totalorder %s67, %s68
    %p80 = scmp.eq.s32.totalorder %s16, 1
    %p81 = por %p79, %p80
    %p83 = scmp.ne.s32.totalorder %s68, %s82
    %p84 = scmp.eq.s32.totalorder %s16, 0
    %p85 = por %p83, %p84
    %s87 = sadd.s32 %s86, 1
    %p90 = scmp.eq.s32.totalorder %s10, 1
    %p91 = scmp.ne.s32.totalorder %s86, %s88
    %p92 = scmp.eq.s32.totalorder %s10, 0
    %p93 = por %p91, %p92
    %p94 = scmp.ne.s32.totalorder %s86, %s88
    %p95 = scmp.eq.s32.totalorder %s15, 1
    %p96 = por %p94, %p95
    %p97 = scmp.ne.s32.totalorder %s88, %s89
    %p98 = scmp.eq.s32.totalorder %s15, 0
    %p99 = por %p97, %p98
    %p100 = scmp.ne.s32.totalorder %s88, %s89
    %p101 = scmp.eq.s32.totalorder %s16, 1
    %p102 = por %p100, %p101
    %p104 = scmp.ne.s32.totalorder %s89, %s103
    %p105 = scmp.eq.s32.totalorder %s16, 0
    %p106 = por %p104, %p105
    %s107 = ssub.s32 %s10, %s17
    %p108 = scmp.eq.s32.totalorder %s107, 0
    %s110 = sadd.s32 %s109, 1
    %s111 = scalar_select %p108, %s109, %s110
    %p114 = pneg %p108
    %p115 = scmp.eq.s32.totalorder %s10, 1
    %p116 = por %p114, %p115
    %p117 = scmp.ne.s32.totalorder %s109, %s112
    %p118 = scmp.eq.s32.totalorder %s10, 0
    %p119 = por %p117, %p118
    %p120 = scmp.ne.s32.totalorder %s109, %s112
    %p121 = scmp.eq.s32.totalorder %s15, 1
    %p122 = por %p120, %p121
    %p123 = scmp.ne.s32.totalorder %s112, %s113
    %p124 = scmp.eq.s32.totalorder %s15, 0
    %p125 = por %p123, %p124
    %p126 = scmp.ne.s32.totalorder %s112, %s113
    %p127 = scmp.eq.s32.totalorder %s16, 1
    %p128 = por %p126, %p127
    %p130 = scmp.ne.s32.totalorder %s113, %s129
    %p131 = scmp.eq.s32.totalorder %s16, 0
    %p132 = por %p130, %p131
    %p133 = scmp.le.s32.totalorder 1, %s10
    %p134 = scmp.lt.s32.totalorder %s10, 3
    %p135 = pnand %p133, %p134
    %p136 = pneg %p135
    // Predicated region
    $region9: #{qnetwork_forward.1} parent=5 // pred_check
      _
    $region10: #{qnetwork_forward.1} parent=5 // pred_check_branch
      %138 = sbr.rel (%p135) target = $region12
    $region11: #{qnetwork_forward.1} parent=5 // pred_region
      %s139 = ssub.s32 %s10, 1
      // Predicated region
      $region13: #{qnetwork_forward.1} parent=11 // pred_check
        %p140 = pneg %p57
      $region14: #{qnetwork_forward.1} parent=11 // pred_check_branch
        %142 = sbr.rel (%p140) target = $region16
      $region15: #{qnetwork_forward.1} parent=11 // pred_region
        _
      $region16: #{qnetwork_forward.1} parent=11 // pred_fallthru
        _
      // Predicated region
      $region17: #{qnetwork_forward.1} parent=11 // pred_check
        %p143 = pneg %p78
      $region18: #{qnetwork_forward.1} parent=11 // pred_check_branch
        %145 = sbr.rel (%p143) target = $region20
      $region19: #{qnetwork_forward.1} parent=11 // pred_region
        _
      $region20: #{qnetwork_forward.1} parent=11 // pred_fallthru
        _
      // Predicated region
      $region21: #{qnetwork_forward.1} parent=11 // pred_check
        %p146 = pneg %p99
      $region22: #{qnetwork_forward.1} parent=11 // pred_check_branch
        %148 = sbr.rel (%p146) target = $region24
      $region23: #{qnetwork_forward.1} parent=11 // pred_region
        _
      $region24: #{qnetwork_forward.1} parent=11 // pred_fallthru
        _
    $region12: #{qnetwork_forward.1} parent=5 // pred_fallthru
      _
    %p149 = scmp.lt.s32.totalorder %s10, 2
    // Predicated region
    $region25: #{qnetwork_forward.1} parent=5 // pred_check
      %p150 = pneg %p149
    $region26: #{qnetwork_forward.1} parent=5 // pred_check_branch
      %152 = sbr.rel (%p150) target = $region28
    $region27: #{qnetwork_forward.1} parent=5 // pred_region
      // Predicated region
      $region29: #{qnetwork_forward.1} parent=27 // pred_check
        %p153 = pneg %p30
      $region30: #{qnetwork_forward.1} parent=27 // pred_check_branch
        %155 = sbr.rel (%p153) target = $region32
      $region31: #{qnetwork_forward.1} parent=27 // pred_region
        %s156 = smul.u32 32, %s10
        %p157 = scmp.lt.s32.totalorder %s156, 63
        %s158 = scalar_select %p157, %s156, 63
        %s159 = smul.addr %s158, 8
        %s160 = scalar_lea.vmem %s0, %s159
        %s161 = smul.u32 32, %s10
      $region32: #{qnetwork_forward.1} parent=27 // pred_fallthru
        _
    $region28: #{qnetwork_forward.1} parent=5 // pred_fallthru
      _
    %p162 = scmp.le.s32.totalorder 1, %s10
    %p163 = scmp.lt.s32.totalorder %s10, 3
    %p164 = pnand %p162, %p163
    %p165 = pneg %p164
    // Predicated region
    $region33: #{qnetwork_forward.1} parent=5 // pred_check
      _
    $region34: #{qnetwork_forward.1} parent=5 // pred_check_branch
      %167 = sbr.rel (%p164) target = $region36
    $region35: #{qnetwork_forward.1} parent=5 // pred_region
      %s168 = ssub.s32 %s10, 1
      %s169 = smul.u32 32, %s15
      %p170 = scmp.lt.s32.totalorder %s169, 63
      %s171 = scalar_select %p170, %s169, 63
      %s172 = smul.addr %s171, 8
      %s173 = scalar_lea.vmem %s0, %s172
      %p174 = pneg %p36
      %p175 = pneg %p33
      %p176 = pneg %p57
      %p177 = pneg %p54
      %p178 = pneg %p78
      %p179 = pneg %p75
      %p180 = pneg %p99
      %p181 = pneg %p96
      %p182 = pneg %p125
      %p183 = pneg %p122
      %s184 = smul.u32 32, %s15
      %p185 = scmp.lt.s32.totalorder %s184, 63
      %s186 = scalar_select %p185, %s184, 63
      %s187 = smul.addr %s186, 8
      %s188 = scalar_lea.vmem %s4, %s187
      %s189 = smul.u32 32, %s15
      %p190 = scmp.lt.s32.totalorder %s189, 63
      %s191 = scalar_select %p190, %s189, 63
      %s192 = smul.addr %s191, 8
      %s193 = scalar_lea.vmem %s0, %s192
      %s194 = smul.u32 32, %s15
      %s195 = smul.u32 32, %s15
      %p196 = scmp.lt.s32.totalorder %s195, 63
      %s197 = scalar_select %p196, %s195, 63
      %s198 = smul.addr %s197, 8
      %s199 = scalar_lea.vmem %s4, %s198
      %s200 = smul.u32 32, %s15
      %v201 = vld [vmem:[%s193] sm:$0xff]
      %v202 = vld [vmem:[%s193 + $0x8] sm:$0xff]
      %v203 = vld [vmem:[%s193 + $0x10] sm:$0xff]
      %v204 = vld [vmem:[%s193 + $0x18] sm:$0xff]
      %v205 = vld [vmem:[%s193 + $0x20] sm:$0xff]
      %v206 = vld [vmem:[%s193 + $0x28] sm:$0xff]
      %v207 = vld [vmem:[%s193 + $0x30] sm:$0xff]
      %v208 = vld [vmem:[%s193 + $0x38] sm:$0xff]
      %v209 = vld [vmem:[%s193 + $0x40] sm:$0xff]
      %v210 = vld [vmem:[%s193 + $0x48] sm:$0xff]
      %v211 = vld [vmem:[%s193 + $0x50] sm:$0xff]
      %v212 = vld [vmem:[%s193 + $0x58] sm:$0xff]
      %v213 = vld [vmem:[%s193 + $0x60] sm:$0xff]
      %v214 = vld [vmem:[%s193 + $0x68] sm:$0xff]
      %v215 = vld [vmem:[%s193 + $0x70] sm:$0xff]
      %v216 = vld [vmem:[%s193 + $0x78] sm:$0xff]
      %v217 = vld [vmem:[%s193 + $0x80] sm:$0xff]
      %v218 = vld [vmem:[%s193 + $0x88] sm:$0xff]
      %v219 = vld [vmem:[%s193 + $0x90] sm:$0xff]
      %v220 = vld [vmem:[%s193 + $0x98] sm:$0xff]
      %v221 = vld [vmem:[%s193 + $0xa0] sm:$0xff]
      %v222 = vld [vmem:[%s193 + $0xa8] sm:$0xff]
      %v223 = vld [vmem:[%s193 + $0xb0] sm:$0xff]
      %v224 = vld [vmem:[%s193 + $0xb8] sm:$0xff]
      %v225 = vld [vmem:[%s193 + $0xc0] sm:$0xff]
      %v226 = vld [vmem:[%s193 + $0xc8] sm:$0xff]
      %v227 = vld [vmem:[%s193 + $0xd0] sm:$0xff]
      %v228 = vld [vmem:[%s193 + $0xd8] sm:$0xff]
      %v229 = vld [vmem:[%s193 + $0xe0] sm:$0xff]
      %v230 = vld [vmem:[%s193 + $0xe8] sm:$0xff]
      %v231 = vld [vmem:[%s193 + $0xf0] sm:$0xff]
      %v232 = vld [vmem:[%s193 + $0xf8] sm:$0xff]
      %v233 = vld [vmem:[%s1] sm:$0xff]
      %v234 = vld [vmem:[%s3] sm:$0x1]
      %v235 = vlaneseq
      %v236 = vshrl.u32 %v235, 7
      %v237 = vsub.s32 0, %v236
      %v238 = vrot.slane %v234, %v237
      %vm239 = vcmask 64512
      %v241 = vsel %vm239, %v201, 0
      %v244 = vsel %vm239, %v202, 0
      %v247 = vsel %vm239, %v203, 0
      %v250 = vsel %vm239, %v204, 0
      %v253 = vsel %vm239, %v205, 0
      %v256 = vsel %vm239, %v206, 0
      %v259 = vsel %vm239, %v207, 0
      %v262 = vsel %vm239, %v208, 0
      %v265 = vsel %vm239, %v209, 0
      %v268 = vsel %vm239, %v210, 0
      %v271 = vsel %vm239, %v211, 0
      %v274 = vsel %vm239, %v212, 0
      %v277 = vsel %vm239, %v213, 0
      %v280 = vsel %vm239, %v214, 0
      %v283 = vsel %vm239, %v215, 0
      %v286 = vsel %vm239, %v216, 0
      %v289 = vsel %vm239, %v217, 0
      %v292 = vsel %vm239, %v218, 0
      %v295 = vsel %vm239, %v219, 0
      %v298 = vsel %vm239, %v220, 0
      %v301 = vsel %vm239, %v221, 0
      %v304 = vsel %vm239, %v222, 0
      %v307 = vsel %vm239, %v223, 0
      %v310 = vsel %vm239, %v224, 0
      %v313 = vsel %vm239, %v225, 0
      %v316 = vsel %vm239, %v226, 0
      %v319 = vsel %vm239, %v227, 0
      %v322 = vsel %vm239, %v228, 0
      %v325 = vsel %vm239, %v229, 0
      %v328 = vsel %vm239, %v230, 0
      %v331 = vsel %vm239, %v231, 0
      %v334 = vsel %vm239, %v232, 0
      %336 = vmatprep.subr.mxu0 0.0
      %337 = vmatpush1.msra.mxu0 %v233
      %338 = vmatprep.subr.mxu0 0.0
      %339 = vmatpush1.msra.mxu0 0.0
      %340 = vmatprep.subr.mxu0 0.0
      %341 = vmatpush1.msra.mxu0 0.0
      %342 = vmatprep.subr.mxu0 0.0
      %343 = vmatpush1.msra.mxu0 0.0
      %344 = vmatprep.subr.mxu0 0.0
      %345 = vmatpush1.msra.mxu0 0.0
      %346 = vmatprep.subr.mxu0 0.0
      %347 = vmatpush1.msra.mxu0 0.0
      %348 = vmatprep.subr.mxu0 0.0
      %349 = vmatpush1.msra.mxu0 0.0
      %350 = vmatprep.subr.mxu0 0.0
      %351 = vmatpush1.msra.mxu0 0.0
      %352 = vmatprep.subr.mxu0 0.0
      %353 = vmatpush1.msra.mxu0 0.0
      %354 = vmatprep.subr.mxu0 0.0
      %355 = vmatpush1.msra.mxu0 0.0
      %356 = vmatprep.subr.mxu0 0.0
      %357 = vmatpush1.msra.mxu0 0.0
      %358 = vmatprep.subr.mxu0 0.0
      %359 = vmatpush1.msra.mxu0 0.0
      %360 = vmatprep.subr.mxu0 0.0
      %361 = vmatpush1.msra.mxu0 0.0
      %362 = vmatprep.subr.mxu0 0.0
      %363 = vmatpush1.msra.mxu0 0.0
      %364 = vmatprep.subr.mxu0 0.0
      %365 = vmatpush1.msra.mxu0 0.0
      %366 = vmatprep.subr.mxu0 0.0
      %367 = vmatpush1.msra.mxu0 0.0
      %368 = vmatprep.subr.mxu0 0.0
      %369 = vmatpush1.msra.mxu0 0.0
      %370 = vmatprep.subr.mxu0 0.0
      %371 = vmatpush1.msra.mxu0 0.0
      %372 = vmatprep.subr.mxu0 0.0
      %373 = vmatpush1.msra.mxu0 0.0
      %374 = vmatprep.subr.mxu0 0.0
      %375 = vmatpush1.msra.mxu0 0.0
      %376 = vmatprep.subr.mxu0 0.0
      %377 = vmatpush1.msra.mxu0 0.0
      %378 = vmatprep.subr.mxu0 0.0
      %379 = vmatpush1.msra.mxu0 0.0
      %380 = vmatprep.subr.mxu0 0.0
      %381 = vmatpush1.msra.mxu0 0.0
      %382 = vmatprep.subr.mxu0 0.0
      %383 = vmatpush1.msra.mxu0 0.0
      %384 = vmatprep.subr.mxu0 0.0
      %385 = vmatpush1.msra.mxu0 0.0
      %386 = vmatprep.subr.mxu0 0.0
      %387 = vmatpush1.msra.mxu0 0.0
      %388 = vmatprep.subr.mxu0 0.0
      %389 = vmatpush1.msra.mxu0 0.0
      %390 = vmatprep.subr.mxu0 0.0
      %391 = vmatpush1.msra.mxu0 0.0
      %392 = vmatprep.subr.mxu0 0.0
      %393 = vmatpush1.msra.mxu0 0.0
      %394 = vmatprep.subr.mxu0 0.0
      %395 = vmatpush1.msra.mxu0 0.0
      %396 = vmatprep.subr.mxu0 0.0
      %397 = vmatpush1.msra.mxu0 0.0
      %398 = vmatprep.subr.mxu0 0.0
      %399 = vmatpush1.msra.mxu0 0.0
      %400 = vmatprep.mubr.f32.mxu0 0.0
      %401 = vmatmul.mubr.f32.gmra.mrb[0].mxu0 %v241
      %v402 = vpop.f32.mrb[0].mxu0
      %v403 = vadd.f32 %v238, %v402
      %v404 = vpop.f32.mrb[0].mxu0
      %405 = vmatprep.mubr.f32.mxu0 0.0
      %406 = vmatmul.mubr.f32.gmra.mrb[0].mxu0 %v244
      %v407 = vpop.f32.mrb[0].mxu0
      %v408 = vadd.f32 %v238, %v407
      %v409 = vpop.f32.mrb[0].mxu0
      %410 = vmatprep.mubr.f32.mxu0 0.0
      %411 = vmatmul.mubr.f32.gmra.mrb[0].mxu0 %v247
      %v412 = vpop.f32.mrb[0].mxu0
      %v413 = vadd.f32 %v238, %v412
      %v414 = vpop.f32.mrb[0].mxu0
      %415 = vmatprep.mubr.f32.mxu0 0.0
      %416 = vmatmul.mubr.f32.gmra.mrb[0].mxu0 %v250
      %v417 = vpop.f32.mrb[0].mxu0
      %v418 = vadd.f32 %v238, %v417
      %v419 = vpop.f32.mrb[0].mxu0
      %420 = vmatprep.mubr.f32.mxu0 0.0
      %421 = vmatmul.mubr.f32.gmra.mrb[0].mxu0 %v253
      %v422 = vpop.f32.mrb[0].mxu0
      %v423 = vadd.f32 %v238, %v422
      %v424 = vpop.f32.mrb[0].mxu0
      %425 = vmatprep.mubr.f32.mxu0 0.0
      %426 = vmatmul.mubr.f32.gmra.mrb[0].mxu0 %v256
      %v427 = vpop.f32.mrb[0].mxu0
      %v428 = vadd.f32 %v238, %v427
      %v429 = vpop.f32.mrb[0].mxu0
      %430 = vmatprep.mubr.f32.mxu0 0.0
      %431 = vmatmul.mubr.f32.gmra.mrb[0].mxu0 %v259
      %v432 = vpop.f32.mrb[0].mxu0
      %v433 = vadd.f32 %v238, %v432
      %v434 = vpop.f32.mrb[0].mxu0
      %435 = vmatprep.mubr.f32.mxu0 0.0
      %436 = vmatmul.mubr.f32.gmra.mrb[0].mxu0 %v262
      %v437 = vpop.f32.mrb[0].mxu0
      %v438 = vadd.f32 %v238, %v437
      %v439 = vpop.f32.mrb[0].mxu0
      %440 = vmatprep.mubr.f32.mxu0 0.0
      %441 = vmatmul.mubr.f32.gmra.mrb[0].mxu0 %v265
      %v442 = vpop.f32.mrb[0].mxu0
      %v443 = vadd.f32 %v238, %v442
      %v444 = vpop.f32.mrb[0].mxu0
      %445 = vmatprep.mubr.f32.mxu0 0.0
      %446 = vmatmul.mubr.f32.gmra.mrb[0].mxu0 %v268
      %v447 = vpop.f32.mrb[0].mxu0
      %v448 = vadd.f32 %v238, %v447
      %v449 = vpop.f32.mrb[0].mxu0
      %450 = vmatprep.mubr.f32.mxu0 0.0
      %451 = vmatmul.mubr.f32.gmra.mrb[0].mxu0 %v271
      %v452 = vpop.f32.mrb[0].mxu0
      %v453 = vadd.f32 %v238, %v452
      %v454 = vpop.f32.mrb[0].mxu0
      %455 = vmatprep.mubr.f32.mxu0 0.0
      %456 = vmatmul.mubr.f32.gmra.mrb[0].mxu0 %v274
      %v457 = vpop.f32.mrb[0].mxu0
      %v458 = vadd.f32 %v238, %v457
      %v459 = vpop.f32.mrb[0].mxu0
      %460 = vmatprep.mubr.f32.mxu0 0.0
      %461 = vmatmul.mubr.f32.gmra.mrb[0].mxu0 %v277
      %v462 = vpop.f32.mrb[0].mxu0
      %v463 = vadd.f32 %v238, %v462
      %v464 = vpop.f32.mrb[0].mxu0
      %465 = vmatprep.mubr.f32.mxu0 0.0
      %466 = vmatmul.mubr.f32.gmra.mrb[0].mxu0 %v280
      %v467 = vpop.f32.mrb[0].mxu0
      %v468 = vadd.f32 %v238, %v467
      %v469 = vpop.f32.mrb[0].mxu0
      %470 = vmatprep.mubr.f32.mxu0 0.0
      %471 = vmatmul.mubr.f32.gmra.mrb[0].mxu0 %v283
      %v472 = vpop.f32.mrb[0].mxu0
      %v473 = vadd.f32 %v238, %v472
      %v474 = vpop.f32.mrb[0].mxu0
      %475 = vmatprep.mubr.f32.mxu0 0.0
      %476 = vmatmul.mubr.f32.gmra.mrb[0].mxu0 %v286
      %v477 = vpop.f32.mrb[0].mxu0
      %v478 = vadd.f32 %v238, %v477
      %v479 = vpop.f32.mrb[0].mxu0
      %480 = vmatprep.mubr.f32.mxu0 0.0
      %481 = vmatmul.mubr.f32.gmra.mrb[0].mxu0 %v289
      %v482 = vpop.f32.mrb[0].mxu0
      %v483 = vadd.f32 %v238, %v482
      %v484 = vpop.f32.mrb[0].mxu0
      %485 = vmatprep.mubr.f32.mxu0 0.0
      %486 = vmatmul.mubr.f32.gmra.mrb[0].mxu0 %v292
      %v487 = vpop.f32.mrb[0].mxu0
      %v488 = vadd.f32 %v238, %v487
      %v489 = vpop.f32.mrb[0].mxu0
      %490 = vmatprep.mubr.f32.mxu0 0.0
      %491 = vmatmul.mubr.f32.gmra.mrb[0].mxu0 %v295
      %v492 = vpop.f32.mrb[0].mxu0
      %v493 = vadd.f32 %v238, %v492
      %v494 = vpop.f32.mrb[0].mxu0
      %495 = vmatprep.mubr.f32.mxu0 0.0
      %496 = vmatmul.mubr.f32.gmra.mrb[0].mxu0 %v298
      %v497 = vpop.f32.mrb[0].mxu0
      %v498 = vadd.f32 %v238, %v497
      %v499 = vpop.f32.mrb[0].mxu0
      %500 = vmatprep.mubr.f32.mxu0 0.0
      %501 = vmatmul.mubr.f32.gmra.mrb[0].mxu0 %v301
      %v502 = vpop.f32.mrb[0].mxu0
      %v503 = vadd.f32 %v238, %v502
      %v504 = vpop.f32.mrb[0].mxu0
      %505 = vmatprep.mubr.f32.mxu0 0.0
      %506 = vmatmul.mubr.f32.gmra.mrb[0].mxu0 %v304
      %v507 = vpop.f32.mrb[0].mxu0
      %v508 = vadd.f32 %v238, %v507
      %v509 = vpop.f32.mrb[0].mxu0
      %510 = vmatprep.mubr.f32.mxu0 0.0
      %511 = vmatmul.mubr.f32.gmra.mrb[0].mxu0 %v307
      %v512 = vpop.f32.mrb[0].mxu0
      %v513 = vadd.f32 %v238, %v512
      %v514 = vpop.f32.mrb[0].mxu0
      %515 = vmatprep.mubr.f32.mxu0 0.0
      %516 = vmatmul.mubr.f32.gmra.mrb[0].mxu0 %v310
      %v517 = vpop.f32.mrb[0].mxu0
      %v518 = vadd.f32 %v238, %v517
      %v519 = vpop.f32.mrb[0].mxu0
      %520 = vmatprep.mubr.f32.mxu0 0.0
      %521 = vmatmul.mubr.f32.gmra.mrb[0].mxu0 %v313
      %v522 = vpop.f32.mrb[0].mxu0
      %v523 = vadd.f32 %v238, %v522
      %v524 = vpop.f32.mrb[0].mxu0
      %525 = vmatprep.mubr.f32.mxu0 0.0
      %526 = vmatmul.mubr.f32.gmra.mrb[0].mxu0 %v316
      %v527 = vpop.f32.mrb[0].mxu0
      %v528 = vadd.f32 %v238, %v527
      %v529 = vpop.f32.mrb[0].mxu0
      %530 = vmatprep.mubr.f32.mxu0 0.0
      %531 = vmatmul.mubr.f32.gmra.mrb[0].mxu0 %v319
      %v532 = vpop.f32.mrb[0].mxu0
      %v533 = vadd.f32 %v238, %v532
      %v534 = vpop.f32.mrb[0].mxu0
      %535 = vmatprep.mubr.f32.mxu0 0.0
      %536 = vmatmul.mubr.f32.gmra.mrb[0].mxu0 %v322
      %v537 = vpop.f32.mrb[0].mxu0
      %v538 = vadd.f32 %v238, %v537
      %v539 = vpop.f32.mrb[0].mxu0
      %540 = vmatprep.mubr.f32.mxu0 0.0
      %541 = vmatmul.mubr.f32.gmra.mrb[0].mxu0 %v325
      %v542 = vpop.f32.mrb[0].mxu0
      %v543 = vadd.f32 %v238, %v542
      %v544 = vpop.f32.mrb[0].mxu0
      %545 = vmatprep.mubr.f32.mxu0 0.0
      %546 = vmatmul.mubr.f32.gmra.mrb[0].mxu0 %v328
      %v547 = vpop.f32.mrb[0].mxu0
      %v548 = vadd.f32 %v238, %v547
      %v549 = vpop.f32.mrb[0].mxu0
      %550 = vmatprep.mubr.f32.mxu0 0.0
      %551 = vmatmul.mubr.f32.gmra.mrb[0].mxu0 %v331
      %v552 = vpop.f32.mrb[0].mxu0
      %v553 = vadd.f32 %v238, %v552
      %v554 = vpop.f32.mrb[0].mxu0
      %555 = vmatprep.mubr.f32.mxu0 0.0
      %556 = vmatmul.mubr.f32.gmra.mrb[0].mxu0 %v334
      %v557 = vpop.f32.mrb[0].mxu0
      %v558 = vadd.f32 %v238, %v557
      %v559 = vpop.f32.mrb[0].mxu0
      %560 = vdwg.mxu0
      %v561 = vmax.f32 %v403, 0.0
      %v562 = vmax.f32 %v408, 0.0
      %v563 = vmax.f32 %v413, 0.0
      %v564 = vmax.f32 %v418, 0.0
      %v565 = vmax.f32 %v423, 0.0
      %v566 = vmax.f32 %v428, 0.0
      %v567 = vmax.f32 %v433, 0.0
      %v568 = vmax.f32 %v438, 0.0
      %v569 = vmax.f32 %v443, 0.0
      %v570 = vmax.f32 %v448, 0.0
      %v571 = vmax.f32 %v453, 0.0
      %v572 = vmax.f32 %v458, 0.0
      %v573 = vmax.f32 %v463, 0.0
      %v574 = vmax.f32 %v468, 0.0
      %v575 = vmax.f32 %v473, 0.0
      %v576 = vmax.f32 %v478, 0.0
      %v577 = vmax.f32 %v483, 0.0
      %v578 = vmax.f32 %v488, 0.0
      %v579 = vmax.f32 %v493, 0.0
      %v580 = vmax.f32 %v498, 0.0
      %v581 = vmax.f32 %v503, 0.0
      %v582 = vmax.f32 %v508, 0.0
      %v583 = vmax.f32 %v513, 0.0
      %v584 = vmax.f32 %v518, 0.0
      %v585 = vmax.f32 %v523, 0.0
      %v586 = vmax.f32 %v528, 0.0
      %v587 = vmax.f32 %v533, 0.0
      %v588 = vmax.f32 %v538, 0.0
      %v589 = vmax.f32 %v543, 0.0
      %v590 = vmax.f32 %v548, 0.0
      %v591 = vmax.f32 %v553, 0.0
      %v592 = vmax.f32 %v558, 0.0
      %v593 = vld [vmem:[%s2] sm:$0xff]
      %v594 = vld [vmem:[%s2 + $0x8] sm:$0xff]
      %v595 = vld [vmem:[%s2 + $0x10] sm:$0xff]
      %v596 = vld [vmem:[%s2 + $0x18] sm:$0xff]
      %v597 = vld [vmem:[%s2 + $0x20] sm:$0xff]
      %v598 = vld [vmem:[%s2 + $0x28] sm:$0xff]
      %v599 = vld [vmem:[%s2 + $0x30] sm:$0xff]
      %v600 = vld [vmem:[%s2 + $0x38] sm:$0xff]
      %v601 = vld [vmem:[%s2 + $0x40] sm:$0xff]
      %v602 = vld [vmem:[%s2 + $0x48] sm:$0xff]
      %v603 = vld [vmem:[%s2 + $0x50] sm:$0xff]
      %v604 = vld [vmem:[%s2 + $0x58] sm:$0xff]
      %v605 = vld [vmem:[%s2 + $0x60] sm:$0xff]
      %v606 = vld [vmem:[%s2 + $0x68] sm:$0xff]
      %v607 = vld [vmem:[%s2 + $0x70] sm:$0xff]
      %v608 = vld [vmem:[%s2 + $0x78] sm:$0xff]
      %v609 = vld [vmem:[%s3 + $0x1] sm:$0x1]
      %v610 = vlaneseq
      %v611 = vshrl.u32 %v610, 7
      %v612 = vsub.s32 0, %v611
      %v613 = vrot.slane %v609, %v612
      %614 = vmatprep.subr.mxu0 0.0
      %615 = vmatpush1.msra.mxu0 %v593
      %616 = vmatprep.subr.mxu0 0.0
      %617 = vmatpush1.msra.mxu0 %v594
      %618 = vmatprep.subr.mxu0 0.0
      %619 = vmatpush1.msra.mxu0 %v595
      %620 = vmatprep.subr.mxu0 0.0
      %621 = vmatpush1.msra.mxu0 %v596
      %622 = vmatprep.subr.mxu0 0.0
      %623 = vmatpush1.msra.mxu0 %v597
      %624 = vmatprep.subr.mxu0 0.0
      %625 = vmatpush1.msra.mxu0 %v598
      %626 = vmatprep.subr.mxu0 0.0
      %627 = vmatpush1.msra.mxu0 %v599
      %628 = vmatprep.subr.mxu0 0.0
      %629 = vmatpush1.msra.mxu0 %v600
      %630 = vmatprep.subr.mxu0 0.0
      %631 = vmatpush1.msra.mxu0 %v601
      %632 = vmatprep.subr.mxu0 0.0
      %633 = vmatpush1.msra.mxu0 %v602
      %634 = vmatprep.subr.mxu0 0.0
      %635 = vmatpush1.msra.mxu0 %v603
      %636 = vmatprep.subr.mxu0 0.0
      %637 = vmatpush1.msra.mxu0 %v604
      %638 = vmatprep.subr.mxu0 0.0
      %639 = vmatpush1.msra.mxu0 %v605
      %640 = vmatprep.subr.mxu0 0.0
      %641 = vmatpush1.msra.mxu0 %v606
      %642 = vmatprep.subr.mxu0 0.0
      %643 = vmatpush1.msra.mxu0 %v607
      %644 = vmatprep.subr.mxu0 0.0
      %645 = vmatpush1.msra.mxu0 %v608
      %646 = vmatprep.subr.mxu0 0.0
      %647 = vmatpush1.msra.mxu0 0.0
      %648 = vmatprep.subr.mxu0 0.0
      %649 = vmatpush1.msra.mxu0 0.0
      %650 = vmatprep.subr.mxu0 0.0
      %651 = vmatpush1.msra.mxu0 0.0
      %652 = vmatprep.subr.mxu0 0.0
      %653 = vmatpush1.msra.mxu0 0.0
      %654 = vmatprep.subr.mxu0 0.0
      %655 = vmatpush1.msra.mxu0 0.0
      %656 = vmatprep.subr.mxu0 0.0
      %657 = vmatpush1.msra.mxu0 0.0
      %658 = vmatprep.subr.mxu0 0.0
      %659 = vmatpush1.msra.mxu0 0.0
      %660 = vmatprep.subr.mxu0 0.0
      %661 = vmatpush1.msra.mxu0 0.0
      %662 = vmatprep.subr.mxu0 0.0
      %663 = vmatpush1.msra.mxu0 0.0
      %664 = vmatprep.subr.mxu0 0.0
      %665 = vmatpush1.msra.mxu0 0.0
      %666 = vmatprep.subr.mxu0 0.0
      %667 = vmatpush1.msra.mxu0 0.0
      %668 = vmatprep.subr.mxu0 0.0
      %669 = vmatpush1.msra.mxu0 0.0
      %670 = vmatprep.subr.mxu0 0.0
      %671 = vmatpush1.msra.mxu0 0.0
      %672 = vmatprep.subr.mxu0 0.0
      %673 = vmatpush1.msra.mxu0 0.0
      %674 = vmatprep.subr.mxu0 0.0
      %675 = vmatpush1.msra.mxu0 0.0
      %676 = vmatprep.subr.mxu0 0.0
      %677 = vmatpush1.msra.mxu0 0.0
      %678 = vmatprep.mubr.f32.mxu0 0.0
      %679 = vmatmul.mubr.f32.gmra.mrb[0].mxu0 %v561
      %v680 = vpop.f32.mrb[0].mxu0
      %v681 = vadd.f32 %v613, %v680
      %v682 = vpop.f32.mrb[0].mxu0
      %683 = vmatprep.mubr.f32.mxu0 0.0
      %684 = vmatmul.mubr.f32.gmra.mrb[0].mxu0 %v562
      %v685 = vpop.f32.mrb[0].mxu0
      %v686 = vadd.f32 %v613, %v685
      %v687 = vpop.f32.mrb[0].mxu0
      %688 = vmatprep.mubr.f32.mxu0 0.0
      %689 = vmatmul.mubr.f32.gmra.mrb[0].mxu0 %v563
      %v690 = vpop.f32.mrb[0].mxu0
      %v691 = vadd.f32 %v613, %v690
      %v692 = vpop.f32.mrb[0].mxu0
      %693 = vmatprep.mubr.f32.mxu0 0.0
      %694 = vmatmul.mubr.f32.gmra.mrb[0].mxu0 %v564
      %v695 = vpop.f32.mrb[0].mxu0
      %v696 = vadd.f32 %v613, %v695
      %v697 = vpop.f32.mrb[0].mxu0
      %698 = vmatprep.mubr.f32.mxu0 0.0
      %699 = vmatmul.mubr.f32.gmra.mrb[0].mxu0 %v565
      %v700 = vpop.f32.mrb[0].mxu0
      %v701 = vadd.f32 %v613, %v700
      %v702 = vpop.f32.mrb[0].mxu0
      %703 = vmatprep.mubr.f32.mxu0 0.0
      %704 = vmatmul.mubr.f32.gmra.mrb[0].mxu0 %v566
      %v705 = vpop.f32.mrb[0].mxu0
      %v706 = vadd.f32 %v613, %v705
      %v707 = vpop.f32.mrb[0].mxu0
      %708 = vmatprep.mubr.f32.mxu0 0.0
      %709 = vmatmul.mubr.f32.gmra.mrb[0].mxu0 %v567
      %v710 = vpop.f32.mrb[0].mxu0
      %v711 = vadd.f32 %v613, %v710
      %v712 = vpop.f32.mrb[0].mxu0
      %713 = vmatprep.mubr.f32.mxu0 0.0
      %714 = vmatmul.mubr.f32.gmra.mrb[0].mxu0 %v568
      %v715 = vpop.f32.mrb[0].mxu0
      %v716 = vadd.f32 %v613, %v715
      %v717 = vpop.f32.mrb[0].mxu0
      %718 = vmatprep.mubr.f32.mxu0 0.0
      %719 = vmatmul.mubr.f32.gmra.mrb[0].mxu0 %v569
      %v720 = vpop.f32.mrb[0].mxu0
      %v721 = vadd.f32 %v613, %v720
      %v722 = vpop.f32.mrb[0].mxu0
      %723 = vmatprep.mubr.f32.mxu0 0.0
      %724 = vmatmul.mubr.f32.gmra.mrb[0].mxu0 %v570
      %v725 = vpop.f32.mrb[0].mxu0
      %v726 = vadd.f32 %v613, %v725
      %v727 = vpop.f32.mrb[0].mxu0
      %728 = vmatprep.mubr.f32.mxu0 0.0
      %729 = vmatmul.mubr.f32.gmra.mrb[0].mxu0 %v571
      %v730 = vpop.f32.mrb[0].mxu0
      %v731 = vadd.f32 %v613, %v730
      %v732 = vpop.f32.mrb[0].mxu0
      %733 = vmatprep.mubr.f32.mxu0 0.0
      %734 = vmatmul.mubr.f32.gmra.mrb[0].mxu0 %v572
      %v735 = vpop.f32.mrb[0].mxu0
      %v736 = vadd.f32 %v613, %v735
      %v737 = vpop.f32.mrb[0].mxu0
      %738 = vmatprep.mubr.f32.mxu0 0.0
      %739 = vmatmul.mubr.f32.gmra.mrb[0].mxu0 %v573
      %v740 = vpop.f32.mrb[0].mxu0
      %v741 = vadd.f32 %v613, %v740
      %v742 = vpop.f32.mrb[0].mxu0
      %743 = vmatprep.mubr.f32.mxu0 0.0
      %744 = vmatmul.mubr.f32.gmra.mrb[0].mxu0 %v574
      %v745 = vpop.f32.mrb[0].mxu0
      %v746 = vadd.f32 %v613, %v745
      %v747 = vpop.f32.mrb[0].mxu0
      %748 = vmatprep.mubr.f32.mxu0 0.0
      %749 = vmatmul.mubr.f32.gmra.mrb[0].mxu0 %v575
      %v750 = vpop.f32.mrb[0].mxu0
      %v751 = vadd.f32 %v613, %v750
      %v752 = vpop.f32.mrb[0].mxu0
      %753 = vmatprep.mubr.f32.mxu0 0.0
      %754 = vmatmul.mubr.f32.gmra.mrb[0].mxu0 %v576
      %v755 = vpop.f32.mrb[0].mxu0
      %v756 = vadd.f32 %v613, %v755
      %v757 = vpop.f32.mrb[0].mxu0
      %758 = vmatprep.mubr.f32.mxu0 0.0
      %759 = vmatmul.mubr.f32.gmra.mrb[0].mxu0 %v577
      %v760 = vpop.f32.mrb[0].mxu0
      %v761 = vadd.f32 %v613, %v760
      %v762 = vpop.f32.mrb[0].mxu0
      %763 = vmatprep.mubr.f32.mxu0 0.0
      %764 = vmatmul.mubr.f32.gmra.mrb[0].mxu0 %v578
      %v765 = vpop.f32.mrb[0].mxu0
      %v766 = vadd.f32 %v613, %v765
      %v767 = vpop.f32.mrb[0].mxu0
      %768 = vmatprep.mubr.f32.mxu0 0.0
      %769 = vmatmul.mubr.f32.gmra.mrb[0].mxu0 %v579
      %v770 = vpop.f32.mrb[0].mxu0
      %v771 = vadd.f32 %v613, %v770
      %v772 = vpop.f32.mrb[0].mxu0
      %773 = vmatprep.mubr.f32.mxu0 0.0
      %774 = vmatmul.mubr.f32.gmra.mrb[0].mxu0 %v580
      %v775 = vpop.f32.mrb[0].mxu0
      %v776 = vadd.f32 %v613, %v775
      %v777 = vpop.f32.mrb[0].mxu0
      %778 = vmatprep.mubr.f32.mxu0 0.0
      %779 = vmatmul.mubr.f32.gmra.mrb[0].mxu0 %v581
      %v780 = vpop.f32.mrb[0].mxu0
      %v781 = vadd.f32 %v613, %v780
      %v782 = vpop.f32.mrb[0].mxu0
      %783 = vmatprep.mubr.f32.mxu0 0.0
      %784 = vmatmul.mubr.f32.gmra.mrb[0].mxu0 %v582
      %v785 = vpop.f32.mrb[0].mxu0
      %v786 = vadd.f32 %v613, %v785
      %v787 = vpop.f32.mrb[0].mxu0
      %788 = vmatprep.mubr.f32.mxu0 0.0
      %789 = vmatmul.mubr.f32.gmra.mrb[0].mxu0 %v583
      %v790 = vpop.f32.mrb[0].mxu0
      %v791 = vadd.f32 %v613, %v790
      %v792 = vpop.f32.mrb[0].mxu0
      %793 = vmatprep.mubr.f32.mxu0 0.0
      %794 = vmatmul.mubr.f32.gmra.mrb[0].mxu0 %v584
      %v795 = vpop.f32.mrb[0].mxu0
      %v796 = vadd.f32 %v613, %v795
      %v797 = vpop.f32.mrb[0].mxu0
      %798 = vmatprep.mubr.f32.mxu0 0.0
      %799 = vmatmul.mubr.f32.gmra.mrb[0].mxu0 %v585
      %v800 = vpop.f32.mrb[0].mxu0
      %v801 = vadd.f32 %v613, %v800
      %v802 = vpop.f32.mrb[0].mxu0
      %803 = vmatprep.mubr.f32.mxu0 0.0
      %804 = vmatmul.mubr.f32.gmra.mrb[0].mxu0 %v586
      %v805 = vpop.f32.mrb[0].mxu0
      %v806 = vadd.f32 %v613, %v805
      %v807 = vpop.f32.mrb[0].mxu0
      %808 = vmatprep.mubr.f32.mxu0 0.0
      %809 = vmatmul.mubr.f32.gmra.mrb[0].mxu0 %v587
      %v810 = vpop.f32.mrb[0].mxu0
      %v811 = vadd.f32 %v613, %v810
      %v812 = vpop.f32.mrb[0].mxu0
      %813 = vmatprep.mubr.f32.mxu0 0.0
      %814 = vmatmul.mubr.f32.gmra.mrb[0].mxu0 %v588
      %v815 = vpop.f32.mrb[0].mxu0
      %v816 = vadd.f32 %v613, %v815
      %v817 = vpop.f32.mrb[0].mxu0
      %818 = vmatprep.mubr.f32.mxu0 0.0
      %819 = vmatmul.mubr.f32.gmra.mrb[0].mxu0 %v589
      %v820 = vpop.f32.mrb[0].mxu0
      %v821 = vadd.f32 %v613, %v820
      %v822 = vpop.f32.mrb[0].mxu0
      %823 = vmatprep.mubr.f32.mxu0 0.0
      %824 = vmatmul.mubr.f32.gmra.mrb[0].mxu0 %v590
      %v825 = vpop.f32.mrb[0].mxu0
      %v826 = vadd.f32 %v613, %v825
      %v827 = vpop.f32.mrb[0].mxu0
      %828 = vmatprep.mubr.f32.mxu0 0.0
      %829 = vmatmul.mubr.f32.gmra.mrb[0].mxu0 %v591
      %v830 = vpop.f32.mrb[0].mxu0
      %v831 = vadd.f32 %v613, %v830
      %v832 = vpop.f32.mrb[0].mxu0
      %833 = vmatprep.mubr.f32.mxu0 0.0
      %834 = vmatmul.mubr.f32.gmra.mrb[0].mxu0 %v592
      %v835 = vpop.f32.mrb[0].mxu0
      %v836 = vadd.f32 %v613, %v835
      %v837 = vpop.f32.mrb[0].mxu0
      %838 = vdwg.mxu0
      %v839 = vmax.f32 %v681, 0.0
      %v840 = vmax.f32 %v686, 0.0
      %v841 = vmax.f32 %v691, 0.0
      %v842 = vmax.f32 %v696, 0.0
      %v843 = vmax.f32 %v701, 0.0
      %v844 = vmax.f32 %v706, 0.0
      %v845 = vmax.f32 %v711, 0.0
      %v846 = vmax.f32 %v716, 0.0
      %v847 = vmax.f32 %v721, 0.0
      %v848 = vmax.f32 %v726, 0.0
      %v849 = vmax.f32 %v731, 0.0
      %v850 = vmax.f32 %v736, 0.0
      %v851 = vmax.f32 %v741, 0.0
      %v852 = vmax.f32 %v746, 0.0
      %v853 = vmax.f32 %v751, 0.0
      %v854 = vmax.f32 %v756, 0.0
      %v855 = vmax.f32 %v761, 0.0
      %v856 = vmax.f32 %v766, 0.0
      %v857 = vmax.f32 %v771, 0.0
      %v858 = vmax.f32 %v776, 0.0
      %v859 = vmax.f32 %v781, 0.0
      %v860 = vmax.f32 %v786, 0.0
      %v861 = vmax.f32 %v791, 0.0
      %v862 = vmax.f32 %v796, 0.0
      %v863 = vmax.f32 %v801, 0.0
      %v864 = vmax.f32 %v806, 0.0
      %v865 = vmax.f32 %v811, 0.0
      %v866 = vmax.f32 %v816, 0.0
      %v867 = vmax.f32 %v821, 0.0
      %v868 = vmax.f32 %v826, 0.0
      %v869 = vmax.f32 %v831, 0.0
      %v870 = vmax.f32 %v836, 0.0
      %s871 = scalar_lea.vmem %s2, 128
      %v872 = vld [vmem:[%s871] sm:$0xff]
      %v873 = vld [vmem:[%s871 + $0x8] sm:$0xff]
      %v874 = vld [vmem:[%s871 + $0x10] sm:$0xff]
      %v875 = vld [vmem:[%s871 + $0x18] sm:$0xff]
      %v876 = vld [vmem:[%s871 + $0x20] sm:$0xff]
      %v877 = vld [vmem:[%s871 + $0x28] sm:$0xff]
      %v878 = vld [vmem:[%s871 + $0x30] sm:$0xff]
      %v879 = vld [vmem:[%s871 + $0x38] sm:$0xff]
      %v880 = vld [vmem:[%s871 + $0x40] sm:$0xff]
      %v881 = vld [vmem:[%s871 + $0x48] sm:$0xff]
      %v882 = vld [vmem:[%s871 + $0x50] sm:$0xff]
      %v883 = vld [vmem:[%s871 + $0x58] sm:$0xff]
      %v884 = vld [vmem:[%s871 + $0x60] sm:$0xff]
      %v885 = vld [vmem:[%s871 + $0x68] sm:$0xff]
      %v886 = vld [vmem:[%s871 + $0x70] sm:$0xff]
      %v887 = vld [vmem:[%s871 + $0x78] sm:$0xff]
      %v888 = vld [vmem:[%s3 + $0x2] sm:$0x1]
      %v889 = vlaneseq
      %v890 = vshrl.u32 %v889, 7
      %v891 = vsub.s32 0, %v890
      %v892 = vrot.slane %v888, %v891
      %893 = vmatprep.subr.mxu0 0.0
      %894 = vmatpush1.msra.mxu0 %v872
      %895 = vmatprep.subr.mxu0 0.0
      %896 = vmatpush1.msra.mxu0 %v873
      %897 = vmatprep.subr.mxu0 0.0
      %898 = vmatpush1.msra.mxu0 %v874
      %899 = vmatprep.subr.mxu0 0.0
      %900 = vmatpush1.msra.mxu0 %v875
      %901 = vmatprep.subr.mxu0 0.0
      %902 = vmatpush1.msra.mxu0 %v876
      %903 = vmatprep.subr.mxu0 0.0
      %904 = vmatpush1.msra.mxu0 %v877
      %905 = vmatprep.subr.mxu0 0.0
      %906 = vmatpush1.msra.mxu0 %v878
      %907 = vmatprep.subr.mxu0 0.0
      %908 = vmatpush1.msra.mxu0 %v879
      %909 = vmatprep.subr.mxu0 0.0
      %910 = vmatpush1.msra.mxu0 %v880
      %911 = vmatprep.subr.mxu0 0.0
      %912 = vmatpush1.msra.mxu0 %v881
      %913 = vmatprep.subr.mxu0 0.0
      %914 = vmatpush1.msra.mxu0 %v882
      %915 = vmatprep.subr.mxu0 0.0
      %916 = vmatpush1.msra.mxu0 %v883
      %917 = vmatprep.subr.mxu0 0.0
      %918 = vmatpush1.msra.mxu0 %v884
      %919 = vmatprep.subr.mxu0 0.0
      %920 = vmatpush1.msra.mxu0 %v885
      %921 = vmatprep.subr.mxu0 0.0
      %922 = vmatpush1.msra.mxu0 %v886
      %923 = vmatprep.subr.mxu0 0.0
      %924 = vmatpush1.msra.mxu0 %v887
      %925 = vmatprep.subr.mxu0 0.0
      %926 = vmatpush1.msra.mxu0 0.0
      %927 = vmatprep.subr.mxu0 0.0
      %928 = vmatpush1.msra.mxu0 0.0
      %929 = vmatprep.subr.mxu0 0.0
      %930 = vmatpush1.msra.mxu0 0.0
      %931 = vmatprep.subr.mxu0 0.0
      %932 = vmatpush1.msra.mxu0 0.0
      %933 = vmatprep.subr.mxu0 0.0
      %934 = vmatpush1.msra.mxu0 0.0
      %935 = vmatprep.subr.mxu0 0.0
      %936 = vmatpush1.msra.mxu0 0.0
      %937 = vmatprep.subr.mxu0 0.0
      %938 = vmatpush1.msra.mxu0 0.0
      %939 = vmatprep.subr.mxu0 0.0
      %940 = vmatpush1.msra.mxu0 0.0
      %941 = vmatprep.subr.mxu0 0.0
      %942 = vmatpush1.msra.mxu0 0.0
      %943 = vmatprep.subr.mxu0 0.0
      %944 = vmatpush1.msra.mxu0 0.0
      %945 = vmatprep.subr.mxu0 0.0
      %946 = vmatpush1.msra.mxu0 0.0
      %947 = vmatprep.subr.mxu0 0.0
      %948 = vmatpush1.msra.mxu0 0.0
      %949 = vmatprep.subr.mxu0 0.0
      %950 = vmatpush1.msra.mxu0 0.0
      %951 = vmatprep.subr.mxu0 0.0
      %952 = vmatpush1.msra.mxu0 0.0
      %953 = vmatprep.subr.mxu0 0.0
      %954 = vmatpush1.msra.mxu0 0.0
      %955 = vmatprep.subr.mxu0 0.0
      %956 = vmatpush1.msra.mxu0 0.0
      %957 = vmatprep.mubr.f32.mxu0 0.0
      %958 = vmatmul.mubr.f32.gmra.mrb[0].mxu0 %v839
      %v959 = vpop.f32.mrb[0].mxu0
      %v960 = vadd.f32 %v892, %v959
      %v961 = vpop.f32.mrb[0].mxu0
      %962 = vmatprep.mubr.f32.mxu0 0.0
      %963 = vmatmul.mubr.f32.gmra.mrb[0].mxu0 %v840
      %v964 = vpop.f32.mrb[0].mxu0
      %v965 = vadd.f32 %v892, %v964
      %v966 = vpop.f32.mrb[0].mxu0
      %967 = vmatprep.mubr.f32.mxu0 0.0
      %968 = vmatmul.mubr.f32.gmra.mrb[0].mxu0 %v841
      %v969 = vpop.f32.mrb[0].mxu0
      %v970 = vadd.f32 %v892, %v969
      %v971 = vpop.f32.mrb[0].mxu0
      %972 = vmatprep.mubr.f32.mxu0 0.0
      %973 = vmatmul.mubr.f32.gmra.mrb[0].mxu0 %v842
      %v974 = vpop.f32.mrb[0].mxu0
      %v975 = vadd.f32 %v892, %v974
      %v976 = vpop.f32.mrb[0].mxu0
      %977 = vmatprep.mubr.f32.mxu0 0.0
      %978 = vmatmul.mubr.f32.gmra.mrb[0].mxu0 %v843
      %v979 = vpop.f32.mrb[0].mxu0
      %v980 = vadd.f32 %v892, %v979
      %v981 = vpop.f32.mrb[0].mxu0
      %982 = vmatprep.mubr.f32.mxu0 0.0
      %983 = vmatmul.mubr.f32.gmra.mrb[0].mxu0 %v844
      %v984 = vpop.f32.mrb[0].mxu0
      %v985 = vadd.f32 %v892, %v984
      %v986 = vpop.f32.mrb[0].mxu0
      %987 = vmatprep.mubr.f32.mxu0 0.0
      %988 = vmatmul.mubr.f32.gmra.mrb[0].mxu0 %v845
      %v989 = vpop.f32.mrb[0].mxu0
      %v990 = vadd.f32 %v892, %v989
      %v991 = vpop.f32.mrb[0].mxu0
      %992 = vmatprep.mubr.f32.mxu0 0.0
      %993 = vmatmul.mubr.f32.gmra.mrb[0].mxu0 %v846
      %v994 = vpop.f32.mrb[0].mxu0
      %v995 = vadd.f32 %v892, %v994
      %v996 = vpop.f32.mrb[0].mxu0
      %997 = vmatprep.mubr.f32.mxu0 0.0
      %998 = vmatmul.mubr.f32.gmra.mrb[0].mxu0 %v847
      %v999 = vpop.f32.mrb[0].mxu0
      %v1000 = vadd.f32 %v892, %v999
      %v1001 = vpop.f32.mrb[0].mxu0
      %1002 = vmatprep.mubr.f32.mxu0 0.0
      %1003 = vmatmul.mubr.f32.gmra.mrb[0].mxu0 %v848
      %v1004 = vpop.f32.mrb[0].mxu0
      %v1005 = vadd.f32 %v892, %v1004
      %v1006 = vpop.f32.mrb[0].mxu0
      %1007 = vmatprep.mubr.f32.mxu0 0.0
      %1008 = vmatmul.mubr.f32.gmra.mrb[0].mxu0 %v849
      %v1009 = vpop.f32.mrb[0].mxu0
      %v1010 = vadd.f32 %v892, %v1009
      %v1011 = vpop.f32.mrb[0].mxu0
      %1012 = vmatprep.mubr.f32.mxu0 0.0
      %1013 = vmatmul.mubr.f32.gmra.mrb[0].mxu0 %v850
      %v1014 = vpop.f32.mrb[0].mxu0
      %v1015 = vadd.f32 %v892, %v1014
      %v1016 = vpop.f32.mrb[0].mxu0
      %1017 = vmatprep.mubr.f32.mxu0 0.0
      %1018 = vmatmul.mubr.f32.gmra.mrb[0].mxu0 %v851
      %v1019 = vpop.f32.mrb[0].mxu0
      %v1020 = vadd.f32 %v892, %v1019
      %v1021 = vpop.f32.mrb[0].mxu0
      %1022 = vmatprep.mubr.f32.mxu0 0.0
      %1023 = vmatmul.mubr.f32.gmra.mrb[0].mxu0 %v852
      %v1024 = vpop.f32.mrb[0].mxu0
      %v1025 = vadd.f32 %v892, %v1024
      %v1026 = vpop.f32.mrb[0].mxu0
      %1027 = vmatprep.mubr.f32.mxu0 0.0
      %1028 = vmatmul.mubr.f32.gmra.mrb[0].mxu0 %v853
      %v1029 = vpop.f32.mrb[0].mxu0
      %v1030 = vadd.f32 %v892, %v1029
      %v1031 = vpop.f32.mrb[0].mxu0
      %1032 = vmatprep.mubr.f32.mxu0 0.0
      %1033 = vmatmul.mubr.f32.gmra.mrb[0].mxu0 %v854
      %v1034 = vpop.f32.mrb[0].mxu0
      %v1035 = vadd.f32 %v892, %v1034
      %v1036 = vpop.f32.mrb[0].mxu0
      %1037 = vmatprep.mubr.f32.mxu0 0.0
      %1038 = vmatmul.mubr.f32.gmra.mrb[0].mxu0 %v855
      %v1039 = vpop.f32.mrb[0].mxu0
      %v1040 = vadd.f32 %v892, %v1039
      %v1041 = vpop.f32.mrb[0].mxu0
      %1042 = vmatprep.mubr.f32.mxu0 0.0
      %1043 = vmatmul.mubr.f32.gmra.mrb[0].mxu0 %v856
      %v1044 = vpop.f32.mrb[0].mxu0
      %v1045 = vadd.f32 %v892, %v1044
      %v1046 = vpop.f32.mrb[0].mxu0
      %1047 = vmatprep.mubr.f32.mxu0 0.0
      %1048 = vmatmul.mubr.f32.gmra.mrb[0].mxu0 %v857
      %v1049 = vpop.f32.mrb[0].mxu0
      %v1050 = vadd.f32 %v892, %v1049
      %v1051 = vpop.f32.mrb[0].mxu0
      %1052 = vmatprep.mubr.f32.mxu0 0.0
      %1053 = vmatmul.mubr.f32.gmra.mrb[0].mxu0 %v858
      %v1054 = vpop.f32.mrb[0].mxu0
      %v1055 = vadd.f32 %v892, %v1054
      %v1056 = vpop.f32.mrb[0].mxu0
      %1057 = vmatprep.mubr.f32.mxu0 0.0
      %1058 = vmatmul.mubr.f32.gmra.mrb[0].mxu0 %v859
      %v1059 = vpop.f32.mrb[0].mxu0
      %v1060 = vadd.f32 %v892, %v1059
      %v1061 = vpop.f32.mrb[0].mxu0
      %1062 = vmatprep.mubr.f32.mxu0 0.0
      %1063 = vmatmul.mubr.f32.gmra.mrb[0].mxu0 %v860
      %v1064 = vpop.f32.mrb[0].mxu0
      %v1065 = vadd.f32 %v892, %v1064
      %v1066 = vpop.f32.mrb[0].mxu0
      %1067 = vmatprep.mubr.f32.mxu0 0.0
      %1068 = vmatmul.mubr.f32.gmra.mrb[0].mxu0 %v861
      %v1069 = vpop.f32.mrb[0].mxu0
      %v1070 = vadd.f32 %v892, %v1069
      %v1071 = vpop.f32.mrb[0].mxu0
      %1072 = vmatprep.mubr.f32.mxu0 0.0
      %1073 = vmatmul.mubr.f32.gmra.mrb[0].mxu0 %v862
      %v1074 = vpop.f32.mrb[0].mxu0
      %v1075 = vadd.f32 %v892, %v1074
      %v1076 = vpop.f32.mrb[0].mxu0
      %1077 = vmatprep.mubr.f32.mxu0 0.0
      %1078 = vmatmul.mubr.f32.gmra.mrb[0].mxu0 %v863
      %v1079 = vpop.f32.mrb[0].mxu0
      %v1080 = vadd.f32 %v892, %v1079
      %v1081 = vpop.f32.mrb[0].mxu0
      %1082 = vmatprep.mubr.f32.mxu0 0.0
      %1083 = vmatmul.mubr.f32.gmra.mrb[0].mxu0 %v864
      %v1084 = vpop.f32.mrb[0].mxu0
      %v1085 = vadd.f32 %v892, %v1084
      %v1086 = vpop.f32.mrb[0].mxu0
      %1087 = vmatprep.mubr.f32.mxu0 0.0
      %1088 = vmatmul.mubr.f32.gmra.mrb[0].mxu0 %v865
      %v1089 = vpop.f32.mrb[0].mxu0
      %v1090 = vadd.f32 %v892, %v1089
      %v1091 = vpop.f32.mrb[0].mxu0
      %1092 = vmatprep.mubr.f32.mxu0 0.0
      %1093 = vmatmul.mubr.f32.gmra.mrb[0].mxu0 %v866
      %v1094 = vpop.f32.mrb[0].mxu0
      %v1095 = vadd.f32 %v892, %v1094
      %v1096 = vpop.f32.mrb[0].mxu0
      %1097 = vmatprep.mubr.f32.mxu0 0.0
      %1098 = vmatmul.mubr.f32.gmra.mrb[0].mxu0 %v867
      %v1099 = vpop.f32.mrb[0].mxu0
      %v1100 = vadd.f32 %v892, %v1099
      %v1101 = vpop.f32.mrb[0].mxu0
      %1102 = vmatprep.mubr.f32.mxu0 0.0
      %1103 = vmatmul.mubr.f32.gmra.mrb[0].mxu0 %v868
      %v1104 = vpop.f32.mrb[0].mxu0
      %v1105 = vadd.f32 %v892, %v1104
      %v1106 = vpop.f32.mrb[0].mxu0
      %1107 = vmatprep.mubr.f32.mxu0 0.0
      %1108 = vmatmul.mubr.f32.gmra.mrb[0].mxu0 %v869
      %v1109 = vpop.f32.mrb[0].mxu0
      %v1110 = vadd.f32 %v892, %v1109
      %v1111 = vpop.f32.mrb[0].mxu0
      %1112 = vmatprep.mubr.f32.mxu0 0.0
      %1113 = vmatmul.mubr.f32.gmra.mrb[0].mxu0 %v870
      %v1114 = vpop.f32.mrb[0].mxu0
      %v1115 = vadd.f32 %v892, %v1114
      %v1116 = vpop.f32.mrb[0].mxu0
      %1117 = vdwg.mxu0
      %v1118 = vmax.f32 %v960, 0.0
      %v1119 = vmax.f32 %v965, 0.0
      %v1120 = vmax.f32 %v970, 0.0
      %v1121 = vmax.f32 %v975, 0.0
      %v1122 = vmax.f32 %v980, 0.0
      %v1123 = vmax.f32 %v985, 0.0
      %v1124 = vmax.f32 %v990, 0.0
      %v1125 = vmax.f32 %v995, 0.0
      %v1126 = vmax.f32 %v1000, 0.0
      %v1127 = vmax.f32 %v1005, 0.0
      %v1128 = vmax.f32 %v1010, 0.0
      %v1129 = vmax.f32 %v1015, 0.0
      %v1130 = vmax.f32 %v1020, 0.0
      %v1131 = vmax.f32 %v1025, 0.0
      %v1132 = vmax.f32 %v1030, 0.0
      %v1133 = vmax.f32 %v1035, 0.0
      %v1134 = vmax.f32 %v1040, 0.0
      %v1135 = vmax.f32 %v1045, 0.0
      %v1136 = vmax.f32 %v1050, 0.0
      %v1137 = vmax.f32 %v1055, 0.0
      %v1138 = vmax.f32 %v1060, 0.0
      %v1139 = vmax.f32 %v1065, 0.0
      %v1140 = vmax.f32 %v1070, 0.0
      %v1141 = vmax.f32 %v1075, 0.0
      %v1142 = vmax.f32 %v1080, 0.0
      %v1143 = vmax.f32 %v1085, 0.0
      %v1144 = vmax.f32 %v1090, 0.0
      %v1145 = vmax.f32 %v1095, 0.0
      %v1146 = vmax.f32 %v1100, 0.0
      %v1147 = vmax.f32 %v1105, 0.0
      %v1148 = vmax.f32 %v1110, 0.0
      %v1149 = vmax.f32 %v1115, 0.0
      %s1150 = scalar_lea.vmem %s2, 256
      %v1151 = vld [vmem:[%s1150] sm:$0xff]
      %v1152 = vld [vmem:[%s1150 + $0x8] sm:$0xff]
      %v1153 = vld [vmem:[%s1150 + $0x10] sm:$0xff]
      %v1154 = vld [vmem:[%s1150 + $0x18] sm:$0xff]
      %v1155 = vld [vmem:[%s1150 + $0x20] sm:$0xff]
      %v1156 = vld [vmem:[%s1150 + $0x28] sm:$0xff]
      %v1157 = vld [vmem:[%s1150 + $0x30] sm:$0xff]
      %v1158 = vld [vmem:[%s1150 + $0x38] sm:$0xff]
      %v1159 = vld [vmem:[%s1150 + $0x40] sm:$0xff]
      %v1160 = vld [vmem:[%s1150 + $0x48] sm:$0xff]
      %v1161 = vld [vmem:[%s1150 + $0x50] sm:$0xff]
      %v1162 = vld [vmem:[%s1150 + $0x58] sm:$0xff]
      %v1163 = vld [vmem:[%s1150 + $0x60] sm:$0xff]
      %v1164 = vld [vmem:[%s1150 + $0x68] sm:$0xff]
      %v1165 = vld [vmem:[%s1150 + $0x70] sm:$0xff]
      %v1166 = vld [vmem:[%s1150 + $0x78] sm:$0xff]
      %v1167 = vld [vmem:[%s3 + $0x3] sm:$0x1]
      %v1168 = vlaneseq
      %v1169 = vshrl.u32 %v1168, 7
      %v1170 = vsub.s32 0, %v1169
      %v1171 = vrot.slane %v1167, %v1170
      %1172 = vmatprep.subr.mxu0 0.0
      %1173 = vmatpush1.msra.mxu0 %v1151
      %1174 = vmatprep.subr.mxu0 0.0
      %1175 = vmatpush1.msra.mxu0 %v1152
      %1176 = vmatprep.subr.mxu0 0.0
      %1177 = vmatpush1.msra.mxu0 %v1153
      %1178 = vmatprep.subr.mxu0 0.0
      %1179 = vmatpush1.msra.mxu0 %v1154
      %1180 = vmatprep.subr.mxu0 0.0
      %1181 = vmatpush1.msra.mxu0 %v1155
      %1182 = vmatprep.subr.mxu0 0.0
      %1183 = vmatpush1.msra.mxu0 %v1156
      %1184 = vmatprep.subr.mxu0 0.0
      %1185 = vmatpush1.msra.mxu0 %v1157
      %1186 = vmatprep.subr.mxu0 0.0
      %1187 = vmatpush1.msra.mxu0 %v1158
      %1188 = vmatprep.subr.mxu0 0.0
      %1189 = vmatpush1.msra.mxu0 %v1159
      %1190 = vmatprep.subr.mxu0 0.0
      %1191 = vmatpush1.msra.mxu0 %v1160
      %1192 = vmatprep.subr.mxu0 0.0
      %1193 = vmatpush1.msra.mxu0 %v1161
      %1194 = vmatprep.subr.mxu0 0.0
      %1195 = vmatpush1.msra.mxu0 %v1162
      %1196 = vmatprep.subr.mxu0 0.0
      %1197 = vmatpush1.msra.mxu0 %v1163
      %1198 = vmatprep.subr.mxu0 0.0
      %1199 = vmatpush1.msra.mxu0 %v1164
      %1200 = vmatprep.subr.mxu0 0.0
      %1201 = vmatpush1.msra.mxu0 %v1165
      %1202 = vmatprep.subr.mxu0 0.0
      %1203 = vmatpush1.msra.mxu0 %v1166
      %1204 = vmatprep.subr.mxu0 0.0
      %1205 = vmatpush1.msra.mxu0 0.0
      %1206 = vmatprep.subr.mxu0 0.0
      %1207 = vmatpush1.msra.mxu0 0.0
      %1208 = vmatprep.subr.mxu0 0.0
      %1209 = vmatpush1.msra.mxu0 0.0
      %1210 = vmatprep.subr.mxu0 0.0
      %1211 = vmatpush1.msra.mxu0 0.0
      %1212 = vmatprep.subr.mxu0 0.0
      %1213 = vmatpush1.msra.mxu0 0.0
      %1214 = vmatprep.subr.mxu0 0.0
      %1215 = vmatpush1.msra.mxu0 0.0
      %1216 = vmatprep.subr.mxu0 0.0
      %1217 = vmatpush1.msra.mxu0 0.0
      %1218 = vmatprep.subr.mxu0 0.0
      %1219 = vmatpush1.msra.mxu0 0.0
      %1220 = vmatprep.subr.mxu0 0.0
      %1221 = vmatpush1.msra.mxu0 0.0
      %1222 = vmatprep.subr.mxu0 0.0
      %1223 = vmatpush1.msra.mxu0 0.0
      %1224 = vmatprep.subr.mxu0 0.0
      %1225 = vmatpush1.msra.mxu0 0.0
      %1226 = vmatprep.subr.mxu0 0.0
      %1227 = vmatpush1.msra.mxu0 0.0
      %1228 = vmatprep.subr.mxu0 0.0
      %1229 = vmatpush1.msra.mxu0 0.0
      %1230 = vmatprep.subr.mxu0 0.0
      %1231 = vmatpush1.msra.mxu0 0.0
      %1232 = vmatprep.subr.mxu0 0.0
      %1233 = vmatpush1.msra.mxu0 0.0
      %1234 = vmatprep.subr.mxu0 0.0
      %1235 = vmatpush1.msra.mxu0 0.0
      %1236 = vmatprep.mubr.f32.mxu0 0.0
      %1237 = vmatmul.mubr.f32.gmra.mrb[0].mxu0 %v1118
      %v1238 = vpop.f32.mrb[0].mxu0
      %v1239 = vadd.f32 %v1171, %v1238
      %v1240 = vpop.f32.mrb[0].mxu0
      %1241 = vmatprep.mubr.f32.mxu0 0.0
      %1242 = vmatmul.mubr.f32.gmra.mrb[0].mxu0 %v1119
      %v1243 = vpop.f32.mrb[0].mxu0
      %v1244 = vadd.f32 %v1171, %v1243
      %v1245 = vpop.f32.mrb[0].mxu0
      %1246 = vmatprep.mubr.f32.mxu0 0.0
      %1247 = vmatmul.mubr.f32.gmra.mrb[0].mxu0 %v1120
      %v1248 = vpop.f32.mrb[0].mxu0
      %v1249 = vadd.f32 %v1171, %v1248
      %v1250 = vpop.f32.mrb[0].mxu0
      %1251 = vmatprep.mubr.f32.mxu0 0.0
      %1252 = vmatmul.mubr.f32.gmra.mrb[0].mxu0 %v1121
      %v1253 = vpop.f32.mrb[0].mxu0
      %v1254 = vadd.f32 %v1171, %v1253
      %v1255 = vpop.f32.mrb[0].mxu0
      %1256 = vmatprep.mubr.f32.mxu0 0.0
      %1257 = vmatmul.mubr.f32.gmra.mrb[0].mxu0 %v1122
      %v1258 = vpop.f32.mrb[0].mxu0
      %v1259 = vadd.f32 %v1171, %v1258
      %v1260 = vpop.f32.mrb[0].mxu0
      %1261 = vmatprep.mubr.f32.mxu0 0.0
      %1262 = vmatmul.mubr.f32.gmra.mrb[0].mxu0 %v1123
      %v1263 = vpop.f32.mrb[0].mxu0
      %v1264 = vadd.f32 %v1171, %v1263
      %v1265 = vpop.f32.mrb[0].mxu0
      %1266 = vmatprep.mubr.f32.mxu0 0.0
      %1267 = vmatmul.mubr.f32.gmra.mrb[0].mxu0 %v1124
      %v1268 = vpop.f32.mrb[0].mxu0
      %v1269 = vadd.f32 %v1171, %v1268
      %v1270 = vpop.f32.mrb[0].mxu0
      %1271 = vmatprep.mubr.f32.mxu0 0.0
      %1272 = vmatmul.mubr.f32.gmra.mrb[0].mxu0 %v1125
      %v1273 = vpop.f32.mrb[0].mxu0
      %v1274 = vadd.f32 %v1171, %v1273
      %v1275 = vpop.f32.mrb[0].mxu0
      %1276 = vmatprep.mubr.f32.mxu0 0.0
      %1277 = vmatmul.mubr.f32.gmra.mrb[0].mxu0 %v1126
      %v1278 = vpop.f32.mrb[0].mxu0
      %v1279 = vadd.f32 %v1171, %v1278
      %v1280 = vpop.f32.mrb[0].mxu0
      %1281 = vmatprep.mubr.f32.mxu0 0.0
      %1282 = vmatmul.mubr.f32.gmra.mrb[0].mxu0 %v1127
      %v1283 = vpop.f32.mrb[0].mxu0
      %v1284 = vadd.f32 %v1171, %v1283
      %v1285 = vpop.f32.mrb[0].mxu0
      %1286 = vmatprep.mubr.f32.mxu0 0.0
      %1287 = vmatmul.mubr.f32.gmra.mrb[0].mxu0 %v1128
      %v1288 = vpop.f32.mrb[0].mxu0
      %v1289 = vadd.f32 %v1171, %v1288
      %v1290 = vpop.f32.mrb[0].mxu0
      %1291 = vmatprep.mubr.f32.mxu0 0.0
      %1292 = vmatmul.mubr.f32.gmra.mrb[0].mxu0 %v1129
      %v1293 = vpop.f32.mrb[0].mxu0
      %v1294 = vadd.f32 %v1171, %v1293
      %v1295 = vpop.f32.mrb[0].mxu0
      %1296 = vmatprep.mubr.f32.mxu0 0.0
      %1297 = vmatmul.mubr.f32.gmra.mrb[0].mxu0 %v1130
      %v1298 = vpop.f32.mrb[0].mxu0
      %v1299 = vadd.f32 %v1171, %v1298
      %v1300 = vpop.f32.mrb[0].mxu0
      %1301 = vmatprep.mubr.f32.mxu0 0.0
      %1302 = vmatmul.mubr.f32.gmra.mrb[0].mxu0 %v1131
      %v1303 = vpop.f32.mrb[0].mxu0
      %v1304 = vadd.f32 %v1171, %v1303
      %v1305 = vpop.f32.mrb[0].mxu0
      %1306 = vmatprep.mubr.f32.mxu0 0.0
      %1307 = vmatmul.mubr.f32.gmra.mrb[0].mxu0 %v1132
      %v1308 = vpop.f32.mrb[0].mxu0
      %v1309 = vadd.f32 %v1171, %v1308
      %v1310 = vpop.f32.mrb[0].mxu0
      %1311 = vmatprep.mubr.f32.mxu0 0.0
      %1312 = vmatmul.mubr.f32.gmra.mrb[0].mxu0 %v1133
      %v1313 = vpop.f32.mrb[0].mxu0
      %v1314 = vadd.f32 %v1171, %v1313
      %v1315 = vpop.f32.mrb[0].mxu0
      %1316 = vmatprep.mubr.f32.mxu0 0.0
      %1317 = vmatmul.mubr.f32.gmra.mrb[0].mxu0 %v1134
      %v1318 = vpop.f32.mrb[0].mxu0
      %v1319 = vadd.f32 %v1171, %v1318
      %v1320 = vpop.f32.mrb[0].mxu0
      %1321 = vmatprep.mubr.f32.mxu0 0.0
      %1322 = vmatmul.mubr.f32.gmra.mrb[0].mxu0 %v1135
      %v1323 = vpop.f32.mrb[0].mxu0
      %v1324 = vadd.f32 %v1171, %v1323
      %v1325 = vpop.f32.mrb[0].mxu0
      %1326 = vmatprep.mubr.f32.mxu0 0.0
      %1327 = vmatmul.mubr.f32.gmra.mrb[0].mxu0 %v1136
      %v1328 = vpop.f32.mrb[0].mxu0
      %v1329 = vadd.f32 %v1171, %v1328
      %v1330 = vpop.f32.mrb[0].mxu0
      %1331 = vmatprep.mubr.f32.mxu0 0.0
      %1332 = vmatmul.mubr.f32.gmra.mrb[0].mxu0 %v1137
      %v1333 = vpop.f32.mrb[0].mxu0
      %v1334 = vadd.f32 %v1171, %v1333
      %v1335 = vpop.f32.mrb[0].mxu0
      %1336 = vmatprep.mubr.f32.mxu0 0.0
      %1337 = vmatmul.mubr.f32.gmra.mrb[0].mxu0 %v1138
      %v1338 = vpop.f32.mrb[0].mxu0
      %v1339 = vadd.f32 %v1171, %v1338
      %v1340 = vpop.f32.mrb[0].mxu0
      %1341 = vmatprep.mubr.f32.mxu0 0.0
      %1342 = vmatmul.mubr.f32.gmra.mrb[0].mxu0 %v1139
      %v1343 = vpop.f32.mrb[0].mxu0
      %v1344 = vadd.f32 %v1171, %v1343
      %v1345 = vpop.f32.mrb[0].mxu0
      %1346 = vmatprep.mubr.f32.mxu0 0.0
      %1347 = vmatmul.mubr.f32.gmra.mrb[0].mxu0 %v1140
      %v1348 = vpop.f32.mrb[0].mxu0
      %v1349 = vadd.f32 %v1171, %v1348
      %v1350 = vpop.f32.mrb[0].mxu0
      %1351 = vmatprep.mubr.f32.mxu0 0.0
      %1352 = vmatmul.mubr.f32.gmra.mrb[0].mxu0 %v1141
      %v1353 = vpop.f32.mrb[0].mxu0
      %v1354 = vadd.f32 %v1171, %v1353
      %v1355 = vpop.f32.mrb[0].mxu0
      %1356 = vmatprep.mubr.f32.mxu0 0.0
      %1357 = vmatmul.mubr.f32.gmra.mrb[0].mxu0 %v1142
      %v1358 = vpop.f32.mrb[0].mxu0
      %v1359 = vadd.f32 %v1171, %v1358
      %v1360 = vpop.f32.mrb[0].mxu0
      %1361 = vmatprep.mubr.f32.mxu0 0.0
      %1362 = vmatmul.mubr.f32.gmra.mrb[0].mxu0 %v1143
      %v1363 = vpop.f32.mrb[0].mxu0
      %v1364 = vadd.f32 %v1171, %v1363
      %v1365 = vpop.f32.mrb[0].mxu0
      %1366 = vmatprep.mubr.f32.mxu0 0.0
      %1367 = vmatmul.mubr.f32.gmra.mrb[0].mxu0 %v1144
      %v1368 = vpop.f32.mrb[0].mxu0
      %v1369 = vadd.f32 %v1171, %v1368
      %v1370 = vpop.f32.mrb[0].mxu0
      %1371 = vmatprep.mubr.f32.mxu0 0.0
      %1372 = vmatmul.mubr.f32.gmra.mrb[0].mxu0 %v1145
      %v1373 = vpop.f32.mrb[0].mxu0
      %v1374 = vadd.f32 %v1171, %v1373
      %v1375 = vpop.f32.mrb[0].mxu0
      %1376 = vmatprep.mubr.f32.mxu0 0.0
      %1377 = vmatmul.mubr.f32.gmra.mrb[0].mxu0 %v1146
      %v1378 = vpop.f32.mrb[0].mxu0
      %v1379 = vadd.f32 %v1171, %v1378
      %v1380 = vpop.f32.mrb[0].mxu0
      %1381 = vmatprep.mubr.f32.mxu0 0.0
      %1382 = vmatmul.mubr.f32.gmra.mrb[0].mxu0 %v1147
      %v1383 = vpop.f32.mrb[0].mxu0
      %v1384 = vadd.f32 %v1171, %v1383
      %v1385 = vpop.f32.mrb[0].mxu0
      %1386 = vmatprep.mubr.f32.mxu0 0.0
      %1387 = vmatmul.mubr.f32.gmra.mrb[0].mxu0 %v1148
      %v1388 = vpop.f32.mrb[0].mxu0
      %v1389 = vadd.f32 %v1171, %v1388
      %v1390 = vpop.f32.mrb[0].mxu0
      %1391 = vmatprep.mubr.f32.mxu0 0.0
      %1392 = vmatmul.mubr.f32.gmra.mrb[0].mxu0 %v1149
      %v1393 = vpop.f32.mrb[0].mxu0
      %v1394 = vadd.f32 %v1171, %v1393
      %v1395 = vpop.f32.mrb[0].mxu0
      %1396 = vdwg.mxu0
      %vm1397 = vcmask 31744
      %1398 = vst.msk [vmem:[%s199] sm:$0xff] %vm1397, %v1239
      %1399 = vst.msk [vmem:[%s199 + $0x8] sm:$0xff] %vm1397, %v1244
      %1400 = vst.msk [vmem:[%s199 + $0x10] sm:$0xff] %vm1397, %v1249
      %1401 = vst.msk [vmem:[%s199 + $0x18] sm:$0xff] %vm1397, %v1254
      %1402 = vst.msk [vmem:[%s199 + $0x20] sm:$0xff] %vm1397, %v1259
      %1403 = vst.msk [vmem:[%s199 + $0x28] sm:$0xff] %vm1397, %v1264
      %1404 = vst.msk [vmem:[%s199 + $0x30] sm:$0xff] %vm1397, %v1269
      %1405 = vst.msk [vmem:[%s199 + $0x38] sm:$0xff] %vm1397, %v1274
      %1406 = vst.msk [vmem:[%s199 + $0x40] sm:$0xff] %vm1397, %v1279
      %1407 = vst.msk [vmem:[%s199 + $0x48] sm:$0xff] %vm1397, %v1284
      %1408 = vst.msk [vmem:[%s199 + $0x50] sm:$0xff] %vm1397, %v1289
      %1409 = vst.msk [vmem:[%s199 + $0x58] sm:$0xff] %vm1397, %v1294
      %1410 = vst.msk [vmem:[%s199 + $0x60] sm:$0xff] %vm1397, %v1299
      %1411 = vst.msk [vmem:[%s199 + $0x68] sm:$0xff] %vm1397, %v1304
      %1412 = vst.msk [vmem:[%s199 + $0x70] sm:$0xff] %vm1397, %v1309
      %1413 = vst.msk [vmem:[%s199 + $0x78] sm:$0xff] %vm1397, %v1314
      %1414 = vst.msk [vmem:[%s199 + $0x80] sm:$0xff] %vm1397, %v1319
      %1415 = vst.msk [vmem:[%s199 + $0x88] sm:$0xff] %vm1397, %v1324
      %1416 = vst.msk [vmem:[%s199 + $0x90] sm:$0xff] %vm1397, %v1329
      %1417 = vst.msk [vmem:[%s199 + $0x98] sm:$0xff] %vm1397, %v1334
      %1418 = vst.msk [vmem:[%s199 + $0xa0] sm:$0xff] %vm1397, %v1339
      %1419 = vst.msk [vmem:[%s199 + $0xa8] sm:$0xff] %vm1397, %v1344
      %1420 = vst.msk [vmem:[%s199 + $0xb0] sm:$0xff] %vm1397, %v1349
      %1421 = vst.msk [vmem:[%s199 + $0xb8] sm:$0xff] %vm1397, %v1354
      %1422 = vst.msk [vmem:[%s199 + $0xc0] sm:$0xff] %vm1397, %v1359
      %1423 = vst.msk [vmem:[%s199 + $0xc8] sm:$0xff] %vm1397, %v1364
      %1424 = vst.msk [vmem:[%s199 + $0xd0] sm:$0xff] %vm1397, %v1369
      %1425 = vst.msk [vmem:[%s199 + $0xd8] sm:$0xff] %vm1397, %v1374
      %1426 = vst.msk [vmem:[%s199 + $0xe0] sm:$0xff] %vm1397, %v1379
      %1427 = vst.msk [vmem:[%s199 + $0xe8] sm:$0xff] %vm1397, %v1384
      %1428 = vst.msk [vmem:[%s199 + $0xf0] sm:$0xff] %vm1397, %v1389
      %1429 = vst.msk [vmem:[%s199 + $0xf8] sm:$0xff] %vm1397, %v1394
      %s1430 = smul.u32 32, %s15
      %p1431 = scmp.lt.s32.totalorder %s1430, 63
      %s1432 = scalar_select %p1431, %s1430, 63
      %s1433 = smul.addr %s1432, 8
      %s1434 = scalar_lea.vmem %s4, %s1433
      // Predicated region
      $region37: #{qnetwork_forward.1} parent=35 // pred_check
        %p1435 = pneg %p122
      $region38: #{qnetwork_forward.1} parent=35 // pred_check_branch
        %1437 = sbr.rel (%p1435) target = $region40
      $region39: #{qnetwork_forward.1} parent=35 // pred_region
        %s1438 = smul.u32 32, %s15
      $region40: #{qnetwork_forward.1} parent=35 // pred_fallthru
        _
    $region36: #{qnetwork_forward.1} parent=5 // pred_fallthru
      _
    %p1439 = scmp.le.s32.totalorder 2, %s10
    // Predicated region
    $region41: #{qnetwork_forward.1} parent=5 // pred_check
      %p1440 = pneg %p1439
    $region42: #{qnetwork_forward.1} parent=5 // pred_check_branch
      %1442 = sbr.rel (%p1440) target = $region44
    $region43: #{qnetwork_forward.1} parent=5 // pred_region
      %s1443 = ssub.s32 %s10, 2
      // Predicated region
      $region45: #{qnetwork_forward.1} parent=43 // pred_check
        %p1444 = pneg %p128
      $region46: #{qnetwork_forward.1} parent=43 // pred_check_branch
        %1446 = sbr.rel (%p1444) target = $region48
      $region47: #{qnetwork_forward.1} parent=43 // pred_region
        %s1447 = smul.u32 32, %s16
        %p1448 = scmp.lt.s32.totalorder %s1447, 63
        %s1449 = scalar_select %p1448, %s1447, 63
        %s1450 = smul.addr %s1449, 8
        %s1451 = scalar_lea.vmem %s4, %s1450
      $region48: #{qnetwork_forward.1} parent=43 // pred_fallthru
        _
    $region44: #{qnetwork_forward.1} parent=5 // pred_fallthru
      _
  $region6: #{qnetwork_forward.1} parent=0 // loop_footer
    %s14 = sadd.s32 1, %s10
  $region7: #{qnetwork_forward.1} parent=0 // loop_footer_branch
    %9 = sbr.rel target = $region3
  $region8: #{qnetwork_forward.1} parent=0 // loop_exit
    _

</llo_original>
